<compile_context>
chip_gen: v7x
topology: tpu7x:2x2x1
jax: 0.10.0
libtpu: 0.0.40
codegen_flags: <defaults>
</compile_context>

<pallas_src>
import jax
import jax.numpy as jnp
import numpy as np
from jax import lax
from jax.experimental import pallas as pl
from jax.experimental.pallas import tpu as pltpu

TAU = 0.1                 # os.environ 'gumbel_tau' default
INV_TAU = 1.0 / TAU
EPS = 1e-10
NEG_SLOPE = 0.2           # cfg.negativeslope
NEG_BIG = -9e15
GT_THRESH = 0.01
_HIGH = jax.lax.Precision.HIGHEST


# ---------------------------------------------------------------- kernel ----

def _make_glcn_kernel(feature_obs_size, k_hop, skip_connection, g, stacked):
    """Fused GLCN forward kernel for one graph (one grid step).

    Refs (in order):
      x(N,F), gumbel(N,N), link_pack(Fobs, N+1),
      weights: one stacked (k_hop, Fin, G+2) ref  OR  k_hop (Fin_k, G+2) refs,
      h_out(N,G), adj_out(N,N)
    """

    def kernel(x_ref, gum_ref, link_ref, *refs):
        h_out_ref = refs[-2]
        adj_out_ref = refs[-1]
        w_refs = refs[:-2]

        x = x_ref[...]                                   # (N, F)
        n = x.shape[0]

        # ---- link prediction: gumbel-sigmoid on  |h_i - h_j| . a_link ------
        # (Fobs, N, N) layout: the reduction over Fobs is over the MAJOR axis
        # -> pure VPU adds, no lane-padded slab, no XLU cross-lane reduce.
        h_t = link_ref[:, :n]                            # (Fobs, N)  = h_obs^T
        al = link_ref[:, n:n + 1]                        # (Fobs, 1)  = a_link
        diff = jnp.abs(h_t[:, :, None] - h_t[:, None, :])    # (Fobs, N, N)
        e_link = jnp.sum(diff * al[:, :, None], axis=0)      # (N, N)
        a = jax.nn.sigmoid((e_link + gum_ref[...]) * INV_TAU)
        rows = lax.broadcasted_iota(jnp.int32, (n, n), 0)
        cols = lax.broadcasted_iota(jnp.int32, (n, n), 1)
        eye = (rows == cols).astype(jnp.float32)
        # A = A - diag(diag(A)); A = A + I   ==  set diagonal to 1
        adj = a * (1.0 - eye) + eye
        adj_out_ref[...] = adj

        # ---- k-hop masked attention propagation (A, H stay on-chip) --------
        h = x
        for k in range(k_hop):
            # Folded weights: [Ws | Wq@a_q | Wv@a_v]  -> one MXU pass.
            w_all = w_refs[0][k] if stacked else w_refs[k][...]   # (Fin, G+2)
            hv = jnp.dot(h, w_all, precision=_HIGH,
                         preferred_element_type=jnp.float32)       # (N, G+2)
            wh = hv[:, :g]                                         # (N, G)
            q = hv[:, g:g + 1]                                     # (N, 1)
            v = hv[:, g + 1:g + 2]                                 # (N, 1)
            # Rank-1 outer product on the VPU instead of a K=1 MXU matmul.
            e = q * v.reshape(1, n)                                # (N, N)
            e = jnp.where(e > 0, e, NEG_SLOPE * e)                 # leaky_relu
            e = jnp.where(adj > GT_THRESH, e, NEG_BIG)
            # Row-wise softmax (exact divide: numerical parity with the ref;
            # at (N,1) size the divide is essentially free).  The diagonal of
            # adj is always 1 > GT_THRESH, so every row has >=1 unmasked entry.
            m = jnp.max(e, axis=1, keepdims=True)
            p = jnp.exp(e - m)
            attn = p / jnp.sum(p, axis=1, keepdims=True)
            h_new = jnp.maximum(
                jnp.dot(attn, wh, precision=_HIGH,
                        preferred_element_type=jnp.float32), 0.0)
            if skip_connection:
                h_new = h_new + h
            h = h_new

        h_out_ref[...] = h

    return kernel


# ---------------------------------------------------------------- wrapper ---

def _glcn_pallas(X, gumbel, params, feature_obs_size, k_hop, skip_connection):
    """Batched fused forward: X (B,N,F), gumbel (B,N,N) -> H (B,N,G), A (B,N,N)."""
    B, N, F = X.shape
    G = params["Ws"][0].shape[1]
    dt = jnp.float32

    # Fold the attention vectors and Wq/Wv into the Ws matmul at trace time
    # (exact by associativity):  W_all_k = [Ws_k | Wq_k@a[:G] | Wv_k@a[G:]].
    w_all = []
    for k in range(k_hop):
        wq_col = jnp.dot(params["Wq"][k], params["a"][k][:G, :], precision=_HIGH)
        wv_col = jnp.dot(params["Wv"][k], params["a"][k][G:, :], precision=_HIGH)
        w_all.append(jnp.concatenate([params["Ws"][k], wq_col, wv_col], axis=1))

    stacked = all(w.shape == w_all[0].shape for w in w_all)
    if stacked:
        fin = w_all[0].shape[0]
        w_args = [jnp.stack(w_all, axis=0)]                       # (k_hop, Fin, G+2)
        w_specs = [pl.BlockSpec((k_hop, fin, G + 2), lambda b: (0, 0, 0))]
    else:  # hop-0 Fin differs from later hops -> pass per-hop (rare path)
        w_args = w_all
        w_specs = [pl.BlockSpec(w.shape, lambda b: (0, 0)) for w in w_all]

    # Link-prediction pack: transposed obs features + a_link column, per graph
    # (transpose done here at trace time -> no in-kernel XLU transpose).
    x_obs_t = jnp.swapaxes(X[:, :, :feature_obs_size], 1, 2)       # (B, Fobs, N)
    a_link = jnp.broadcast_to(params["a_link"][None],
                              (B, feature_obs_size, 1))
    link_pack = jnp.concatenate([x_obs_t, a_link], axis=2)         # (B, Fobs, N+1)

    kernel = _make_glcn_kernel(feature_obs_size, k_hop, skip_connection,
                               G, stacked)

    in_specs = [
        pl.BlockSpec((None, N, F), lambda b: (b, 0, 0)),
        pl.BlockSpec((None, N, N), lambda b: (b, 0, 0)),
        pl.BlockSpec((None, feature_obs_size, N + 1), lambda b: (b, 0, 0)),
        *w_specs,
    ]
    out_specs = (pl.BlockSpec((None, N, G), lambda b: (b, 0, 0)),
                 pl.BlockSpec((None, N, N), lambda b: (b, 0, 0)))

    H, A = pl.pallas_call(
        kernel,
        grid=(B,),
        out_shape=(jax.ShapeDtypeStruct((B, N, G), dt),
                   jax.ShapeDtypeStruct((B, N, N), dt)),
        in_specs=in_specs,
        out_specs=out_specs,
        compiler_params=pltpu.CompilerParams(
            dimension_semantics=("parallel",)),
    )(X, gumbel, link_pack, *w_args)
    return H, A


def glcn_forward(X, params, gumbel_noise, feature_obs_size, k_hop=2,
                 skip_connection=False):
    """Single-graph forward (mini_batch=False path): returns (H, A, X)."""
    H, A = _glcn_pallas(X[None], gumbel_noise[None], params,
                        feature_obs_size, k_hop, skip_connection)
    return H[0], A[0], X


def glcn_forward_batched(X, params, gumbel_noise, feature_obs_size, k_hop=2,
                         skip_connection=False):
    """Batched forward over a parallel grid axis: X (B,N,F), noise (B,N,N)."""
    H, A = _glcn_pallas(X, gumbel_noise, params,
                        feature_obs_size, k_hop, skip_connection)
    return H, A, X


# ------------------------------------------------------------- reference ---

def glcn_ref(X, params, gumbel_noise, feature_obs_size, k_hop=2,
             skip_connection=False):
    h = X[:, :feature_obs_size]
    diff = jnp.abs(h[:, None, :] - h[None, :, :])
    e = jnp.einsum("ijk,kl->ijl", diff, params["a_link"],
                   precision=_HIGH)[..., 0]
    A = jax.nn.sigmoid((e + gumbel_noise) * INV_TAU)
    n = A.shape[0]
    eye = jnp.eye(n, dtype=A.dtype)
    A = A * (1.0 - eye) + eye
    H = X
    for k in range(k_hop):
        G = params["Ws"][k].shape[1]
        Wh = jnp.dot(H, params["Ws"][k], precision=_HIGH)
        q = jnp.dot(jnp.dot(H, params["Wq"][k], precision=_HIGH),
                    params["a"][k][:G, :], precision=_HIGH)
        v = jnp.dot(jnp.dot(H, params["Wv"][k], precision=_HIGH),
                    params["a"][k][G:, :], precision=_HIGH)
        e = jnp.dot(q, v.T, precision=_HIGH)
        e = jnp.where(e > 0, e, NEG_SLOPE * e)
        e = jnp.where(A > GT_THRESH, e, NEG_BIG)
        attn = jax.nn.softmax(e, axis=1)
        Hn = jax.nn.relu(jnp.dot(attn, Wh, precision=_HIGH))
        if skip_connection:
            Hn = Hn + H
        H = Hn
    return H, A, X


# ----------------------------------------------------------------- params ---

def _glorot(key, shape):
    bound = float(np.sqrt(6.0 / (shape[0] + shape[1])))
    return jax.random.uniform(key, shape, jnp.float32, -bound, bound)


def _xavier(key, shape, gain=1.414):
    bound = gain * float(np.sqrt(6.0 / (shape[0] + shape[1])))
    return jax.random.uniform(key, shape, jnp.float32, -bound, bound)


def init_params(key, feature_size, graph_embedding_size, feature_obs_size,
                k_hop=2):
    keys = jax.random.split(key, 1 + 4 * k_hop)
    params = {"a_link": _xavier(keys[0], (feature_obs_size, 1)),
              "Ws": [], "Wq": [], "Wv": [], "a": []}
    idx = 1
    for k in range(k_hop):
        fin = feature_size if k == 0 else graph_embedding_size
        params["Ws"].append(_glorot(keys[idx], (fin, graph_embedding_size))); idx += 1
        params["Wv"].append(_glorot(keys[idx], (fin, graph_embedding_size))); idx += 1
        params["Wq"].append(_glorot(keys[idx], (fin, graph_embedding_size))); idx += 1
        params["a"].append(_xavier(keys[idx], (2 * graph_embedding_size, 1))); idx += 1
    return params


# ------------------------------------------------------------------- main ---

if __name__ == "__main__":
    N = 8                       # num nodes
    FEATURE_SIZE = 32
    GRAPH_EMB = 32
    FEATURE_OBS = 16
    K_HOP = 2

    root = jax.random.PRNGKey(0)
    k_param, k_x, k_u = jax.random.split(root, 3)

    params = init_params(k_param, FEATURE_SIZE, GRAPH_EMB, FEATURE_OBS, K_HOP)
    X = jax.random.normal(k_x, (N, FEATURE_SIZE), jnp.float32)

    # Deterministic gumbel noise (torch.rand_like analogue with fixed key).
    U = jax.random.uniform(k_u, (N, N), jnp.float32)
    gumbel_noise = -jnp.log(-jnp.log(U + EPS) + EPS)

    # ---- single-graph path (mini_batch=False semantics) --------------------
    H, A, X_out = glcn_forward(X, params, gumbel_noise, FEATURE_OBS,
                               k_hop=K_HOP, skip_connection=False)
    jax.block_until_ready((H, A, X_out))

    H_ref, A_ref, _ = glcn_ref(X, params, gumbel_noise, FEATURE_OBS,
                               k_hop=K_HOP, skip_connection=False)
    np.testing.assert_allclose(np.asarray(A), np.asarray(A_ref),
                               rtol=1e-4, atol=1e-5)
    # Remaining H differences are only from the (exact-algebra) Wq@a / Wv@a
    # folding order; everything runs at f32 precision now.
    np.testing.assert_allclose(np.asarray(H), np.asarray(H_ref),
                               rtol=2e-3, atol=1e-4)

    # ---- batched path (parallel grid over graphs; uses both TCs on v7x) ----
    B = 2
    kx2, ku2 = jax.random.split(jax.random.PRNGKey(1), 2)
    Xb = jax.random.normal(kx2, (B, N, FEATURE_SIZE), jnp.float32)
    Ub = jax.random.uniform(ku2, (B, N, N), jnp.float32)
    Gb = -jnp.log(-jnp.log(Ub + EPS) + EPS)
    Hb, Ab, _ = glcn_forward_batched(Xb, params, Gb, FEATURE_OBS,
                                     k_hop=K_HOP, skip_connection=False)
    jax.block_until_ready((Hb, Ab))
    for b in range(B):
        Hr, Ar, _ = glcn_ref(Xb[b], params, Gb[b], FEATURE_OBS,
                             k_hop=K_HOP, skip_connection=False)
        np.testing.assert_allclose(np.asarray(Ab[b]), np.asarray(Ar),
                                   rtol=1e-4, atol=1e-5)
        np.testing.assert_allclose(np.asarray(Hb[b]), np.asarray(Hr),
                                   rtol=2e-3, atol=1e-4)

    print("KERNEL_OK")
</pallas_src>

<mosaic_0001>
module attributes {stable_mosaic.version = 11 : i64} {
  func.func @kernel(%arg0: i32, %arg1: memref<1x8x32xf32, #tpu.memory_space<vmem>>, %arg2: memref<1x8x8xf32, #tpu.memory_space<vmem>>, %arg3: memref<1x16x9xf32, #tpu.memory_space<vmem>>, %arg4: memref<2x32x34xf32, #tpu.memory_space<vmem>>, %arg5: memref<1x8x32xf32, #tpu.memory_space<vmem>>, %arg6: memref<1x8x8xf32, #tpu.memory_space<vmem>>) attributes {dimension_semantics = [#tpu.dimension_semantics<parallel>], iteration_bounds = array<i64: 1>, scalar_prefetch = 0 : i64, scratch_operands = 0 : i64, tpu.core_type = #tpu.core_type<tc>, window_params = [{transform_indices = @transform_0, window_bounds = array<i64: 1, 8, 32>}, {transform_indices = @transform_1, window_bounds = array<i64: 1, 8, 8>}, {transform_indices = @transform_2, window_bounds = array<i64: 1, 16, 9>}, {pipeline_mode = #tpu.pipeline_mode<synchronous>, transform_indices = @transform_3, window_bounds = array<i64: 2, 32, 34>}, {transform_indices = @transform_4, window_bounds = array<i64: 1, 8, 32>}, {transform_indices = @transform_5, window_bounds = array<i64: 1, 8, 8>}]} {
    %c0 = arith.constant 0 : index
    %c0_0 = arith.constant 0 : index
    %c0_1 = arith.constant 0 : index
    %0 = vector.load %arg1[%c0, %c0_0, %c0_1] : memref<1x8x32xf32, #tpu.memory_space<vmem>>, vector<1x8x32xf32>
    %1 = vector.shape_cast %0 : vector<1x8x32xf32> to vector<8x32xf32>
    %c0_2 = arith.constant 0 : index
    %c0_3 = arith.constant 0 : index
    %c0_4 = arith.constant 0 : index
    %2 = vector.load %arg3[%c0_2, %c0_3, %c0_4] : memref<1x16x9xf32, #tpu.memory_space<vmem>>, vector<1x16x8xf32>
    %3 = vector.shape_cast %2 : vector<1x16x8xf32> to vector<16x8xf32>
    %c0_5 = arith.constant 0 : index
    %c0_6 = arith.constant 0 : index
    %c8 = arith.constant 8 : index
    %4 = vector.load %arg3[%c0_5, %c0_6, %c8] : memref<1x16x9xf32, #tpu.memory_space<vmem>>, vector<1x16x1xf32>
    %5 = vector.shape_cast %4 : vector<1x16x1xf32> to vector<16x1xf32>
    %6 = vector.shape_cast %3 : vector<16x8xf32> to vector<16x8x1xf32>
    %7 = vector.shape_cast %3 : vector<16x8xf32> to vector<16x1x8xf32>
    %8 = vector.broadcast %6 : vector<16x8x1xf32> to vector<16x8x8xf32>
    %9 = vector.broadcast %7 : vector<16x1x8xf32> to vector<16x8x8xf32>
    %10 = arith.subf %8, %9 : vector<16x8x8xf32>
    %11 = math.absf %10 : vector<16x8x8xf32>
    %12 = vector.shape_cast %5 : vector<16x1xf32> to vector<16x1x1xf32>
    %13 = vector.broadcast %12 : vector<16x1x1xf32> to vector<16x8x8xf32>
    %14 = arith.mulf %11, %13 : vector<16x8x8xf32>
    %cst = arith.constant dense<0.000000e+00> : vector<8x8xf32>
    %15 = vector.multi_reduction <add>, %14, %cst [0] : vector<16x8x8xf32> to vector<8x8xf32>
    %c0_7 = arith.constant 0 : index
    %c0_8 = arith.constant 0 : index
    %c0_9 = arith.constant 0 : index
    %16 = vector.load %arg2[%c0_7, %c0_8, %c0_9] : memref<1x8x8xf32, #tpu.memory_space<vmem>>, vector<1x8x8xf32>
    %17 = vector.shape_cast %16 : vector<1x8x8xf32> to vector<8x8xf32>
    %18 = arith.addf %15, %17 : vector<8x8xf32>
    %cst_10 = arith.constant 1.000000e+01 : f32
    %19 = vector.broadcast %cst_10 : f32 to vector<8x8xf32>
    %20 = arith.mulf %18, %19 : vector<8x8xf32>
    %21 = arith.negf %20 : vector<8x8xf32>
    %22 = math.exp %21 : vector<8x8xf32>
    %cst_11 = arith.constant 1.000000e+00 : f32
    %23 = vector.broadcast %cst_11 : f32 to vector<8x8xf32>
    %24 = arith.addf %23, %22 : vector<8x8xf32>
    %25 = arith.divf %23, %24 : vector<8x8xf32>
    %26 = tpu.iota {dimensions = array<i32: 0>} : vector<8x8xi32>
    %27 = tpu.iota {dimensions = array<i32: 1>} : vector<8x8xi32>
    %28 = arith.cmpi eq, %26, %27 : vector<8x8xi32>
    %29 = arith.extui %28 : vector<8x8xi1> to vector<8x8xi32>
    %30 = arith.sitofp %29 : vector<8x8xi32> to vector<8x8xf32>
    %cst_12 = arith.constant 1.000000e+00 : f32
    %31 = vector.broadcast %cst_12 : f32 to vector<8x8xf32>
    %32 = arith.subf %31, %30 : vector<8x8xf32>
    %33 = arith.mulf %25, %32 : vector<8x8xf32>
    %34 = arith.addf %33, %30 : vector<8x8xf32>
    %c0_13 = arith.constant 0 : index
    %c0_14 = arith.constant 0 : index
    %c0_15 = arith.constant 0 : index
    %35 = vector.load %arg6[%c0_13, %c0_14, %c0_15] : memref<1x8x8xf32, #tpu.memory_space<vmem>>, vector<1x8x8xf32>
    %36 = vector.shape_cast %35 : vector<1x8x8xf32> to vector<8x8xf32>
    %37 = vector.shape_cast %34 : vector<8x8xf32> to vector<1x8x8xf32>
    tpu.vector_store %arg6[%c0_13, %c0_14, %c0_15], %37 {strides = array<i32>} : memref<1x8x8xf32, #tpu.memory_space<vmem>>, vector<1x8x8xf32>,
    %c0_16 = arith.constant 0 : index
    %c0_17 = arith.constant 0 : index
    %c0_18 = arith.constant 0 : index
    %38 = vector.load %arg4[%c0_16, %c0_17, %c0_18] : memref<2x32x34xf32, #tpu.memory_space<vmem>>, vector<1x32x34xf32>
    %39 = vector.shape_cast %38 : vector<1x32x34xf32> to vector<32x34xf32>
    %cst_19 = arith.constant dense<0.000000e+00> : vector<8x34xf32>
    %40 = tpu.matmul %1, %39, %cst_19 {dimension_numbers = #tpu.dot_dimension_numbers<[1], [0], [0], [1], [0, 0, 1, 1], [], []>, precision = #tpu.contract_precision<fp32>} : vector<8x32xf32>, vector<32x34xf32>, vector<8x34xf32> -> vector<8x34xf32>
    %41 = vector.extract_strided_slice %40 {offsets = [0, 0], sizes = [8, 32], strides = [1, 1]} : vector<8x34xf32> to vector<8x32xf32>
    %42 = vector.extract_strided_slice %40 {offsets = [0, 32], sizes = [8, 1], strides = [1, 1]} : vector<8x34xf32> to vector<8x1xf32>
    %43 = vector.extract_strided_slice %40 {offsets = [0, 33], sizes = [8, 1], strides = [1, 1]} : vector<8x34xf32> to vector<8x1xf32>
    %44 = vector.shape_cast %43 : vector<8x1xf32> to vector<1x8xf32>
    %45 = vector.broadcast %42 : vector<8x1xf32> to vector<8x8xf32>
    %46 = vector.broadcast %44 : vector<1x8xf32> to vector<8x8xf32>
    %47 = arith.mulf %45, %46 : vector<8x8xf32>
    %cst_20 = arith.constant 0.000000e+00 : f32
    %48 = vector.broadcast %cst_20 : f32 to vector<8x8xf32>
    %49 = arith.cmpf ogt, %47, %48 : vector<8x8xf32>
    %cst_21 = arith.constant 2.000000e-01 : f32
    %50 = vector.broadcast %cst_21 : f32 to vector<8x8xf32>
    %51 = arith.mulf %50, %47 : vector<8x8xf32>
    %52 = arith.select %49, %47, %51 : vector<8x8xi1>, vector<8x8xf32>
    %cst_22 = arith.constant 0.00999999977 : f32
    %53 = vector.broadcast %cst_22 : f32 to vector<8x8xf32>
    %54 = arith.cmpf ogt, %34, %53 : vector<8x8xf32>
    %cst_23 = arith.constant -9.000000e+15 : f32
    %55 = vector.broadcast %cst_23 : f32 to vector<8x8xf32>
    %56 = arith.select %54, %52, %55 : vector<8x8xi1>, vector<8x8xf32>
    %cst_24 = arith.constant dense<0xFF800000> : vector<8xf32>
    %57 = vector.multi_reduction <maximumf>, %56, %cst_24 [1] : vector<8x8xf32> to vector<8xf32>
    %58 = vector.shape_cast %57 : vector<8xf32> to vector<8x1xf32>
    %59 = vector.broadcast %58 : vector<8x1xf32> to vector<8x8xf32>
    %60 = arith.subf %56, %59 : vector<8x8xf32>
    %61 = math.exp %60 : vector<8x8xf32>
    %cst_25 = arith.constant dense<0.000000e+00> : vector<8xf32>
    %62 = vector.multi_reduction <add>, %61, %cst_25 [1] : vector<8x8xf32> to vector<8xf32>
    %63 = vector.shape_cast %62 : vector<8xf32> to vector<8x1xf32>
    %64 = vector.broadcast %63 : vector<8x1xf32> to vector<8x8xf32>
    %65 = arith.divf %61, %64 : vector<8x8xf32>
    %cst_26 = arith.constant dense<0.000000e+00> : vector<8x32xf32>
    %66 = tpu.matmul %65, %41, %cst_26 {dimension_numbers = #tpu.dot_dimension_numbers<[1], [0], [0], [1], [0, 0, 1, 1], [], []>, precision = #tpu.contract_precision<fp32>} : vector<8x8xf32>, vector<8x32xf32>, vector<8x32xf32> -> vector<8x32xf32>
    %cst_27 = arith.constant 0.000000e+00 : f32
    %67 = vector.broadcast %cst_27 : f32 to vector<8x32xf32>
    %68 = arith.maximumf %66, %67 : vector<8x32xf32>
    %c1 = arith.constant 1 : index
    %c0_28 = arith.constant 0 : index
    %c0_29 = arith.constant 0 : index
    %69 = vector.load %arg4[%c1, %c0_28, %c0_29] : memref<2x32x34xf32, #tpu.memory_space<vmem>>, vector<1x32x34xf32>
    %70 = vector.shape_cast %69 : vector<1x32x34xf32> to vector<32x34xf32>
    %cst_30 = arith.constant dense<0.000000e+00> : vector<8x34xf32>
    %71 = tpu.matmul %68, %70, %cst_30 {dimension_numbers = #tpu.dot_dimension_numbers<[1], [0], [0], [1], [0, 0, 1, 1], [], []>, precision = #tpu.contract_precision<fp32>} : vector<8x32xf32>, vector<32x34xf32>, vector<8x34xf32> -> vector<8x34xf32>
    %72 = vector.extract_strided_slice %71 {offsets = [0, 0], sizes = [8, 32], strides = [1, 1]} : vector<8x34xf32> to vector<8x32xf32>
    %73 = vector.extract_strided_slice %71 {offsets = [0, 32], sizes = [8, 1], strides = [1, 1]} : vector<8x34xf32> to vector<8x1xf32>
    %74 = vector.extract_strided_slice %71 {offsets = [0, 33], sizes = [8, 1], strides = [1, 1]} : vector<8x34xf32> to vector<8x1xf32>
    %75 = vector.shape_cast %74 : vector<8x1xf32> to vector<1x8xf32>
    %76 = vector.broadcast %73 : vector<8x1xf32> to vector<8x8xf32>
    %77 = vector.broadcast %75 : vector<1x8xf32> to vector<8x8xf32>
    %78 = arith.mulf %76, %77 : vector<8x8xf32>
    %cst_31 = arith.constant 0.000000e+00 : f32
    %79 = vector.broadcast %cst_31 : f32 to vector<8x8xf32>
    %80 = arith.cmpf ogt, %78, %79 : vector<8x8xf32>
    %cst_32 = arith.constant 2.000000e-01 : f32
    %81 = vector.broadcast %cst_32 : f32 to vector<8x8xf32>
    %82 = arith.mulf %81, %78 : vector<8x8xf32>
    %83 = arith.select %80, %78, %82 : vector<8x8xi1>, vector<8x8xf32>
    %cst_33 = arith.constant 0.00999999977 : f32
    %84 = vector.broadcast %cst_33 : f32 to vector<8x8xf32>
    %85 = arith.cmpf ogt, %34, %84 : vector<8x8xf32>
    %cst_34 = arith.constant -9.000000e+15 : f32
    %86 = vector.broadcast %cst_34 : f32 to vector<8x8xf32>
    %87 = arith.select %85, %83, %86 : vector<8x8xi1>, vector<8x8xf32>
    %cst_35 = arith.constant dense<0xFF800000> : vector<8xf32>
    %88 = vector.multi_reduction <maximumf>, %87, %cst_35 [1] : vector<8x8xf32> to vector<8xf32>
    %89 = vector.shape_cast %88 : vector<8xf32> to vector<8x1xf32>
    %90 = vector.broadcast %89 : vector<8x1xf32> to vector<8x8xf32>
    %91 = arith.subf %87, %90 : vector<8x8xf32>
    %92 = math.exp %91 : vector<8x8xf32>
    %cst_36 = arith.constant dense<0.000000e+00> : vector<8xf32>
    %93 = vector.multi_reduction <add>, %92, %cst_36 [1] : vector<8x8xf32> to vector<8xf32>
    %94 = vector.shape_cast %93 : vector<8xf32> to vector<8x1xf32>
    %95 = vector.broadcast %94 : vector<8x1xf32> to vector<8x8xf32>
    %96 = arith.divf %92, %95 : vector<8x8xf32>
    %cst_37 = arith.constant dense<0.000000e+00> : vector<8x32xf32>
    %97 = tpu.matmul %96, %72, %cst_37 {dimension_numbers = #tpu.dot_dimension_numbers<[1], [0], [0], [1], [0, 0, 1, 1], [], []>, precision = #tpu.contract_precision<fp32>} : vector<8x8xf32>, vector<8x32xf32>, vector<8x32xf32> -> vector<8x32xf32>
    %cst_38 = arith.constant 0.000000e+00 : f32
    %98 = vector.broadcast %cst_38 : f32 to vector<8x32xf32>
    %99 = arith.maximumf %97, %98 : vector<8x32xf32>
    %c0_39 = arith.constant 0 : index
    %c0_40 = arith.constant 0 : index
    %c0_41 = arith.constant 0 : index
    %100 = vector.load %arg5[%c0_39, %c0_40, %c0_41] : memref<1x8x32xf32, #tpu.memory_space<vmem>>, vector<1x8x32xf32>
    %101 = vector.shape_cast %100 : vector<1x8x32xf32> to vector<8x32xf32>
    %102 = vector.shape_cast %99 : vector<8x32xf32> to vector<1x8x32xf32>
    tpu.vector_store %arg5[%c0_39, %c0_40, %c0_41], %102 {strides = array<i32>} : memref<1x8x32xf32, #tpu.memory_space<vmem>>, vector<1x8x32xf32>,
    return
  }
  func.func @transform_0(%arg0: i32) -> (i32, i32, i32) {
    %c0_i32 = arith.constant 0 : i32
    %c0_i32_0 = arith.constant 0 : i32
    %c0_i32_1 = arith.constant 0 : i32
    return %arg0, %c0_i32, %c0_i32_0 : i32, i32, i32
  }
  func.func @transform_1(%arg0: i32) -> (i32, i32, i32) {
    %c0_i32 = arith.constant 0 : i32
    %c0_i32_0 = arith.constant 0 : i32
    %c0_i32_1 = arith.constant 0 : i32
    return %arg0, %c0_i32, %c0_i32_0 : i32, i32, i32
  }
  func.func @transform_2(%arg0: i32) -> (i32, i32, i32) {
    %c0_i32 = arith.constant 0 : i32
    %c0_i32_0 = arith.constant 0 : i32
    %c0_i32_1 = arith.constant 0 : i32
    return %arg0, %c0_i32, %c0_i32_0 : i32, i32, i32
  }
  func.func @transform_3(%arg0: i32) -> (i32, i32, i32) {
    %c0_i32 = arith.constant 0 : i32
    %c0_i32_0 = arith.constant 0 : i32
    %c0_i32_1 = arith.constant 0 : i32
    %c0_i32_2 = arith.constant 0 : i32
    return %c0_i32, %c0_i32_0, %c0_i32_1 : i32, i32, i32
  }
  func.func @transform_4(%arg0: i32) -> (i32, i32, i32) {
    %c0_i32 = arith.constant 0 : i32
    %c0_i32_0 = arith.constant 0 : i32
    %c0_i32_1 = arith.constant 0 : i32
    return %arg0, %c0_i32, %c0_i32_0 : i32, i32, i32
  }
  func.func @transform_5(%arg0: i32) -> (i32, i32, i32) {
    %c0_i32 = arith.constant 0 : i32
    %c0_i32_0 = arith.constant 0 : i32
    %c0_i32_1 = arith.constant 0 : i32
    return %arg0, %c0_i32, %c0_i32_0 : i32, i32, i32
  }
}

</mosaic_0001>

<llo_original>
// kernel: tpu_custom_call.1
$region0: #{tpu_custom_call.1}
  #allocation0 [shape = 'u32[]', space=smem, size = 0x4, offset = 0x4, fixed_abs, tag = 'smem constant byte address 0x4 - core index']
  #allocation1 [shape = 'u32[144,128]{1,0:T(1,128)}', space=vmem, size = 0x12000, scoped, tag = 'internal scratch']
  %s0 = inlined_call_operand.vmem [shape: f32[1,8,32], index: 0, kind: input, shape index: {}]
  %s1 = inlined_call_operand.vmem [shape: f32[1,8,8], index: 1, kind: input, shape index: {}]
  %s2 = inlined_call_operand.vmem [shape: f32[1,16,9], index: 2, kind: input, shape index: {}]
  %s3 = inlined_call_operand.hbm [shape: f32[2,32,34], index: 3, kind: input, shape index: {}]
  %s4 = inlined_call_operand.hbm [shape: f32[1,8,32], index: 4, kind: output, shape index: {0}]
  %s5 = inlined_call_operand.hbm [shape: f32[1,8,8], index: 5, kind: output, shape index: {1}]
  %6 = xla_tuple %s4, %s5
  %s7 = sld [smem:[#allocation0]]
  $region38: #{tpu_custom_call.1} parent=0
    _
  %s9 = ssub.s32 1, %s7
  %s10 = scalar_select 0, %s9, %s7
  $region1: #{tpu_custom_call.1} parent=0
    #allocation2 [shape = 'u8[32768]{0}', space=vmem, size = 0x8000, scoped, tag = 'input window, operand 3, single buffered']
    #allocation3 [shape = 's32[1]{0}', space=sflag, size = 0x4, scoped, tag = 'scoped memory for tpu_custom_call.1']
    #allocation4 [shape = 's32[1]{0}', space=sflag, size = 0x4, scoped, tag = 'scoped memory for tpu_custom_call.1']
    #allocation5 [shape = 'u8[4096]{0}', space=vmem, size = 0x1000, scoped, tag = 'output window, operand 0, single buffered']
    #allocation6 [shape = 'u8[4096]{0}', space=vmem, size = 0x1000, scoped, tag = 'output window, operand 1, single buffered']
    #allocation7 [shape = 's32[1]{0}', space=sflag, size = 0x4, scoped, tag = 'scoped memory for tpu_custom_call.1']
    %11 = vsyncpa [#allocation3], 0
    %12 = vsyncpa [#allocation4], 0
    %13 = vsyncpa [#allocation7], 0
    // Predicated region
    $region2: #{tpu_custom_call.1} parent=1 // pred_check
      _
    $region3: #{tpu_custom_call.1} parent=1 // pred_check_branch
      %15 = sbr.rel (0) target = $region5
    $region4: #{tpu_custom_call.1} parent=1 // pred_region
      _
    $region5: #{tpu_custom_call.1} parent=1 // pred_fallthru
      _
    // Predicated region
    $region6: #{tpu_custom_call.1} parent=1 // pred_check
      _
    $region7: #{tpu_custom_call.1} parent=1 // pred_check_branch
      %17 = sbr.rel (0) target = $region9
    $region8: #{tpu_custom_call.1} parent=1 // pred_region
      _
    $region9: #{tpu_custom_call.1} parent=1 // pred_fallthru
      _
    // Predicated region
    $region10: #{tpu_custom_call.1} parent=1 // pred_check
      _
    $region11: #{tpu_custom_call.1} parent=1 // pred_check_branch
      %19 = sbr.rel (0) target = $region13
    $region12: #{tpu_custom_call.1} parent=1 // pred_region
      _
    $region13: #{tpu_custom_call.1} parent=1 // pred_fallthru
      _
    // Predicated region
    $region14: #{tpu_custom_call.1} parent=1 // pred_check
      _
    $region15: #{tpu_custom_call.1} parent=1 // pred_check_branch
      %21 = sbr.rel (0) target = $region17
    $region16: #{tpu_custom_call.1} parent=1 // pred_region
      %s23 = ssub.s32 1024, 1024
      %24 = vsyncadd [#allocation3], %s23
      %s25 = sshll.u32 [#allocation2], 4
      %s26 = int_to_ptr.vmem [resolvable:$true] %s25
      %31 = dma.hbm_to_vmem [thread:$0]  %s3, 1024, %s26, [#allocation3], 128, 128, 8
    $region17: #{tpu_custom_call.1} parent=1 // pred_fallthru
      _
    // Predicated region
    $region18: #{tpu_custom_call.1} parent=1 // pred_check
      _
    $region19: #{tpu_custom_call.1} parent=1 // pred_check_branch
      %33 = sbr.rel (0) target = $region21
    $region20: #{tpu_custom_call.1} parent=1 // pred_region
      %34 = dma.done [#allocation3], 1024
    $region21: #{tpu_custom_call.1} parent=1 // pred_fallthru
      _
    %v35 = vld [vmem:[%s0] sm:$0xff]
    %v36 = vld [vmem:[%s2] sm:$0xff]
    %v37 = vld [vmem:[%s2 + $0x8] sm:$0xff]
    %v38 = vlaneseq
    %v39 = vshrl.u32 %v38, 7
    %v40 = vsub.s32 0, %v39
    %v41 = vrot.slane %v36, %v40
    %43 = vbcast.lane.b32.xlu0 %v41, 256
    %v44 = vpop.permute.xlu0 %43
    %v45 = vlaneseq
    %v46 = vshrl.u32 %v45, 7
    %v47 = vsub.s32 1, %v46
    %v48 = vrot.slane %v36, %v47
    %50 = vbcast.lane.b32.xlu0 %v48, 256
    %v51 = vpop.permute.xlu0 %50
    %v52 = vlaneseq
    %v53 = vshrl.u32 %v52, 7
    %v54 = vsub.s32 2, %v53
    %v55 = vrot.slane %v36, %v54
    %57 = vbcast.lane.b32.xlu0 %v55, 256
    %v58 = vpop.permute.xlu0 %57
    %v59 = vlaneseq
    %v60 = vshrl.u32 %v59, 7
    %v61 = vsub.s32 3, %v60
    %v62 = vrot.slane %v36, %v61
    %64 = vbcast.lane.b32.xlu0 %v62, 256
    %v65 = vpop.permute.xlu0 %64
    %v66 = vlaneseq
    %v67 = vshrl.u32 %v66, 7
    %v68 = vsub.s32 4, %v67
    %v69 = vrot.slane %v36, %v68
    %71 = vbcast.lane.b32.xlu0 %v69, 256
    %v72 = vpop.permute.xlu0 %71
    %v73 = vlaneseq
    %v74 = vshrl.u32 %v73, 7
    %v75 = vsub.s32 5, %v74
    %v76 = vrot.slane %v36, %v75
    %78 = vbcast.lane.b32.xlu0 %v76, 256
    %v79 = vpop.permute.xlu0 %78
    %v80 = vlaneseq
    %v81 = vshrl.u32 %v80, 7
    %v82 = vsub.s32 6, %v81
    %v83 = vrot.slane %v36, %v82
    %85 = vbcast.lane.b32.xlu0 %v83, 256
    %v86 = vpop.permute.xlu0 %85
    %v87 = vlaneseq
    %v88 = vshrl.u32 %v87, 7
    %v89 = vsub.s32 7, %v88
    %v90 = vrot.slane %v36, %v89
    %92 = vbcast.lane.b32.xlu0 %v90, 256
    %v93 = vpop.permute.xlu0 %92
    %v94 = vlaneseq
    %v95 = vshrl.u32 %v94, 7
    %v96 = vsub.s32 0, %v95
    %v97 = vrot.slane %v37, %v96
    %99 = vbcast.lane.b32.xlu0 %v97, 256
    %v100 = vpop.permute.xlu0 %99
    %v101 = vlaneseq
    %v102 = vshrl.u32 %v101, 7
    %v103 = vsub.s32 1, %v102
    %v104 = vrot.slane %v37, %v103
    %106 = vbcast.lane.b32.xlu0 %v104, 256
    %v107 = vpop.permute.xlu0 %106
    %v108 = vlaneseq
    %v109 = vshrl.u32 %v108, 7
    %v110 = vsub.s32 2, %v109
    %v111 = vrot.slane %v37, %v110
    %113 = vbcast.lane.b32.xlu0 %v111, 256
    %v114 = vpop.permute.xlu0 %113
    %v115 = vlaneseq
    %v116 = vshrl.u32 %v115, 7
    %v117 = vsub.s32 3, %v116
    %v118 = vrot.slane %v37, %v117
    %120 = vbcast.lane.b32.xlu0 %v118, 256
    %v121 = vpop.permute.xlu0 %120
    %v122 = vlaneseq
    %v123 = vshrl.u32 %v122, 7
    %v124 = vsub.s32 4, %v123
    %v125 = vrot.slane %v37, %v124
    %127 = vbcast.lane.b32.xlu0 %v125, 256
    %v128 = vpop.permute.xlu0 %127
    %v129 = vlaneseq
    %v130 = vshrl.u32 %v129, 7
    %v131 = vsub.s32 5, %v130
    %v132 = vrot.slane %v37, %v131
    %134 = vbcast.lane.b32.xlu0 %v132, 256
    %v135 = vpop.permute.xlu0 %134
    %v136 = vlaneseq
    %v137 = vshrl.u32 %v136, 7
    %v138 = vsub.s32 6, %v137
    %v139 = vrot.slane %v37, %v138
    %141 = vbcast.lane.b32.xlu0 %v139, 256
    %v142 = vpop.permute.xlu0 %141
    %v143 = vlaneseq
    %v144 = vshrl.u32 %v143, 7
    %v145 = vsub.s32 7, %v144
    %v146 = vrot.slane %v37, %v145
    %148 = vbcast.lane.b32.xlu0 %v146, 256
    %v149 = vpop.permute.xlu0 %148
    %v152 = vcombine.high %v36, %v36
    %v154 = vunpack.c.l.s4 1966171168
    %v155 = vunpack.c.0.s8 %v154
    %v156 = vlaneseq
    %v157 = vshrl.u32 %v156, 7
    %v158 = vsub.s32 %v155, %v157
    %v159 = vrot.slane %v36, %v158
    %v161 = vunpack.c.l.s4 1966171168
    %v162 = vunpack.c.0.s8 %v161
    %v163 = vlaneseq
    %v164 = vshrl.u32 %v163, 7
    %v165 = vsub.s32 %v162, %v164
    %v166 = vrot.slane %v152, %v165
    %v167 = vcombine.high %v159, %v159
    %v168 = vcombine.high %v166, %v166
    %v170 = vunpack.c.l.s4 1966171168
    %v171 = vunpack.c.0.s8 %v170
    %v172 = vlaneseq
    %v173 = vshrl.u32 %v172, 7
    %v174 = vsub.s32 %v171, %v173
    %v175 = vrot.slane %v159, %v174
    %v177 = vunpack.c.l.s4 1966171168
    %v178 = vunpack.c.0.s8 %v177
    %v179 = vlaneseq
    %v180 = vshrl.u32 %v179, 7
    %v181 = vsub.s32 %v178, %v180
    %v182 = vrot.slane %v166, %v181
    %v184 = vunpack.c.l.s4 1966171168
    %v185 = vunpack.c.0.s8 %v184
    %v186 = vlaneseq
    %v187 = vshrl.u32 %v186, 7
    %v188 = vsub.s32 %v185, %v187
    %v189 = vrot.slane %v167, %v188
    %v191 = vunpack.c.l.s4 1966171168
    %v192 = vunpack.c.0.s8 %v191
    %v193 = vlaneseq
    %v194 = vshrl.u32 %v193, 7
    %v195 = vsub.s32 %v192, %v194
    %v196 = vrot.slane %v168, %v195
    %v197 = vcombine.high %v175, %v175
    %v198 = vcombine.high %v182, %v182
    %v199 = vcombine.high %v189, %v189
    %v200 = vcombine.high %v196, %v196
    %v201 = vcombine.high %v37, %v37
    %v203 = vunpack.c.l.s4 1966171168
    %v204 = vunpack.c.0.s8 %v203
    %v205 = vlaneseq
    %v206 = vshrl.u32 %v205, 7
    %v207 = vsub.s32 %v204, %v206
    %v208 = vrot.slane %v37, %v207
    %v210 = vunpack.c.l.s4 1966171168
    %v211 = vunpack.c.0.s8 %v210
    %v212 = vlaneseq
    %v213 = vshrl.u32 %v212, 7
    %v214 = vsub.s32 %v211, %v213
    %v215 = vrot.slane %v201, %v214
    %v216 = vcombine.high %v208, %v208
    %v217 = vcombine.high %v215, %v215
    %v219 = vunpack.c.l.s4 1966171168
    %v220 = vunpack.c.0.s8 %v219
    %v221 = vlaneseq
    %v222 = vshrl.u32 %v221, 7
    %v223 = vsub.s32 %v220, %v222
    %v224 = vrot.slane %v208, %v223
    %v226 = vunpack.c.l.s4 1966171168
    %v227 = vunpack.c.0.s8 %v226
    %v228 = vlaneseq
    %v229 = vshrl.u32 %v228, 7
    %v230 = vsub.s32 %v227, %v229
    %v231 = vrot.slane %v215, %v230
    %v233 = vunpack.c.l.s4 1966171168
    %v234 = vunpack.c.0.s8 %v233
    %v235 = vlaneseq
    %v236 = vshrl.u32 %v235, 7
    %v237 = vsub.s32 %v234, %v236
    %v238 = vrot.slane %v216, %v237
    %v240 = vunpack.c.l.s4 1966171168
    %v241 = vunpack.c.0.s8 %v240
    %v242 = vlaneseq
    %v243 = vshrl.u32 %v242, 7
    %v244 = vsub.s32 %v241, %v243
    %v245 = vrot.slane %v217, %v244
    %v246 = vcombine.high %v224, %v224
    %v247 = vcombine.high %v231, %v231
    %v248 = vcombine.high %v238, %v238
    %v249 = vcombine.high %v245, %v245
    %v250 = vlaneseq
    %v251 = vshrl.u32 %v250, 7
    %v252 = vsub.s32 0, %v251
    %v253 = vrot.slane %v175, %v252
    %v254 = vlaneseq
    %v255 = vshrl.u32 %v254, 7
    %v256 = vsub.s32 0, %v255
    %v257 = vrot.slane %v189, %v256
    %v258 = vlaneseq
    %v259 = vshrl.u32 %v258, 7
    %v260 = vsub.s32 0, %v259
    %v261 = vrot.slane %v197, %v260
    %v262 = vlaneseq
    %v263 = vshrl.u32 %v262, 7
    %v264 = vsub.s32 0, %v263
    %v265 = vrot.slane %v199, %v264
    %v266 = vlaneseq
    %v267 = vshrl.u32 %v266, 7
    %v268 = vsub.s32 0, %v267
    %v269 = vrot.slane %v182, %v268
    %v270 = vlaneseq
    %v271 = vshrl.u32 %v270, 7
    %v272 = vsub.s32 0, %v271
    %v273 = vrot.slane %v196, %v272
    %v274 = vlaneseq
    %v275 = vshrl.u32 %v274, 7
    %v276 = vsub.s32 0, %v275
    %v277 = vrot.slane %v198, %v276
    %v278 = vlaneseq
    %v279 = vshrl.u32 %v278, 7
    %v280 = vsub.s32 0, %v279
    %v281 = vrot.slane %v200, %v280
    %v282 = vlaneseq
    %v283 = vshrl.u32 %v282, 7
    %v284 = vsub.s32 0, %v283
    %v285 = vrot.slane %v224, %v284
    %v286 = vlaneseq
    %v287 = vshrl.u32 %v286, 7
    %v288 = vsub.s32 0, %v287
    %v289 = vrot.slane %v238, %v288
    %v290 = vlaneseq
    %v291 = vshrl.u32 %v290, 7
    %v292 = vsub.s32 0, %v291
    %v293 = vrot.slane %v246, %v292
    %v294 = vlaneseq
    %v295 = vshrl.u32 %v294, 7
    %v296 = vsub.s32 0, %v295
    %v297 = vrot.slane %v248, %v296
    %v298 = vlaneseq
    %v299 = vshrl.u32 %v298, 7
    %v300 = vsub.s32 0, %v299
    %v301 = vrot.slane %v231, %v300
    %v302 = vlaneseq
    %v303 = vshrl.u32 %v302, 7
    %v304 = vsub.s32 0, %v303
    %v305 = vrot.slane %v245, %v304
    %v306 = vlaneseq
    %v307 = vshrl.u32 %v306, 7
    %v308 = vsub.s32 0, %v307
    %v309 = vrot.slane %v247, %v308
    %v310 = vlaneseq
    %v311 = vshrl.u32 %v310, 7
    %v312 = vsub.s32 0, %v311
    %v313 = vrot.slane %v249, %v312
    %v330 = vsub.f32 %v44, %v253
    %v331 = vsub.f32 %v51, %v257
    %v332 = vsub.f32 %v58, %v261
    %v333 = vsub.f32 %v65, %v265
    %v334 = vsub.f32 %v72, %v269
    %v335 = vsub.f32 %v79, %v273
    %v336 = vsub.f32 %v86, %v277
    %v337 = vsub.f32 %v93, %v281
    %v338 = vsub.f32 %v100, %v285
    %v339 = vsub.f32 %v107, %v289
    %v340 = vsub.f32 %v114, %v293
    %v341 = vsub.f32 %v121, %v297
    %v342 = vsub.f32 %v128, %v301
    %v343 = vsub.f32 %v135, %v305
    %v344 = vsub.f32 %v142, %v309
    %v345 = vsub.f32 %v149, %v313
    %v346 = vand.u32 2147483647, %v330
    %v347 = vand.u32 2147483647, %v331
    %v348 = vand.u32 2147483647, %v332
    %v349 = vand.u32 2147483647, %v333
    %v350 = vand.u32 2147483647, %v334
    %v351 = vand.u32 2147483647, %v335
    %v352 = vand.u32 2147483647, %v336
    %v353 = vand.u32 2147483647, %v337
    %v354 = vand.u32 2147483647, %v338
    %v355 = vand.u32 2147483647, %v339
    %v356 = vand.u32 2147483647, %v340
    %v357 = vand.u32 2147483647, %v341
    %v358 = vand.u32 2147483647, %v342
    %v359 = vand.u32 2147483647, %v343
    %v360 = vand.u32 2147483647, %v344
    %v361 = vand.u32 2147483647, %v345
    %362 = vset.pattern.permute.xlu0 8
    %363 = vperm.xlu0 %362, %v253
    %v364 = vpop.permute.xlu0 %363
    %366 = vset.pattern.permute.xlu0 8
    %367 = vperm.xlu0 %366, %v257
    %v368 = vpop.permute.xlu0 %367
    %370 = vset.pattern.permute.xlu0 8
    %371 = vperm.xlu0 %370, %v261
    %v372 = vpop.permute.xlu0 %371
    %374 = vset.pattern.permute.xlu0 8
    %375 = vperm.xlu0 %374, %v265
    %v376 = vpop.permute.xlu0 %375
    %378 = vset.pattern.permute.xlu0 8
    %379 = vperm.xlu0 %378, %v269
    %v380 = vpop.permute.xlu0 %379
    %382 = vset.pattern.permute.xlu0 8
    %383 = vperm.xlu0 %382, %v273
    %v384 = vpop.permute.xlu0 %383
    %386 = vset.pattern.permute.xlu0 8
    %387 = vperm.xlu0 %386, %v277
    %v388 = vpop.permute.xlu0 %387
    %390 = vset.pattern.permute.xlu0 8
    %391 = vperm.xlu0 %390, %v281
    %v392 = vpop.permute.xlu0 %391
    %394 = vset.pattern.permute.xlu0 8
    %395 = vperm.xlu0 %394, %v285
    %v396 = vpop.permute.xlu0 %395
    %398 = vset.pattern.permute.xlu0 8
    %399 = vperm.xlu0 %398, %v289
    %v400 = vpop.permute.xlu0 %399
    %402 = vset.pattern.permute.xlu0 8
    %403 = vperm.xlu0 %402, %v293
    %v404 = vpop.permute.xlu0 %403
    %406 = vset.pattern.permute.xlu0 8
    %407 = vperm.xlu0 %406, %v297
    %v408 = vpop.permute.xlu0 %407
    %410 = vset.pattern.permute.xlu0 8
    %411 = vperm.xlu0 %410, %v301
    %v412 = vpop.permute.xlu0 %411
    %414 = vset.pattern.permute.xlu0 8
    %415 = vperm.xlu0 %414, %v305
    %v416 = vpop.permute.xlu0 %415
    %418 = vset.pattern.permute.xlu0 8
    %419 = vperm.xlu0 %418, %v309
    %v420 = vpop.permute.xlu0 %419
    %422 = vset.pattern.permute.xlu0 8
    %423 = vperm.xlu0 %422, %v313
    %v424 = vpop.permute.xlu0 %423
    %v426 = vmul.f32 %v346, %v364
    %v427 = vmul.f32 %v347, %v368
    %v428 = vmul.f32 %v348, %v372
    %v429 = vmul.f32 %v349, %v376
    %v430 = vmul.f32 %v350, %v380
    %v431 = vmul.f32 %v351, %v384
    %v432 = vmul.f32 %v352, %v388
    %v433 = vmul.f32 %v353, %v392
    %v434 = vmul.f32 %v354, %v396
    %v435 = vmul.f32 %v355, %v400
    %v436 = vmul.f32 %v356, %v404
    %v437 = vmul.f32 %v357, %v408
    %v438 = vmul.f32 %v358, %v412
    %v439 = vmul.f32 %v359, %v416
    %v440 = vmul.f32 %v360, %v420
    %v441 = vmul.f32 %v361, %v424
    %vm442 = vcmask 64512
    %v443 = vsel %vm442, %v426, 0.0
    %v444 = vsel %vm442, %v427, 0.0
    %v445 = vadd.f32 %v443, %v444
    %v446 = vsel %vm442, %v428, 0.0
    %v447 = vadd.f32 %v445, %v446
    %v448 = vsel %vm442, %v429, 0.0
    %v449 = vadd.f32 %v447, %v448
    %v450 = vsel %vm442, %v430, 0.0
    %v451 = vadd.f32 %v449, %v450
    %v452 = vsel %vm442, %v431, 0.0
    %v453 = vadd.f32 %v451, %v452
    %v454 = vsel %vm442, %v432, 0.0
    %v455 = vadd.f32 %v453, %v454
    %v456 = vsel %vm442, %v433, 0.0
    %v457 = vadd.f32 %v455, %v456
    %v458 = vsel %vm442, %v434, 0.0
    %v459 = vadd.f32 %v457, %v458
    %v460 = vsel %vm442, %v435, 0.0
    %v461 = vadd.f32 %v459, %v460
    %v462 = vsel %vm442, %v436, 0.0
    %v463 = vadd.f32 %v461, %v462
    %v464 = vsel %vm442, %v437, 0.0
    %v465 = vadd.f32 %v463, %v464
    %v466 = vsel %vm442, %v438, 0.0
    %v467 = vadd.f32 %v465, %v466
    %v468 = vsel %vm442, %v439, 0.0
    %v469 = vadd.f32 %v467, %v468
    %v470 = vsel %vm442, %v440, 0.0
    %v471 = vadd.f32 %v469, %v470
    %v472 = vsel %vm442, %v441, 0.0
    %v473 = vadd.f32 %v471, %v472
    %v474 = vld [vmem:[%s1] sm:$0xff]
    %v475 = vadd.f32 %v473, %v474
    %v476 = vmul.f32 %v475, 10.0
    %v477 = vxor.u32 %v476, 2147483648
    %v478 = vmul.f32 %v477, 1.442695
    %v479 = vpow.pop %v478
    %v480 = vadd.f32 %v479, 1.0
    %v481 = vrcp.pop %v480
    %v482 = vmul.f32 1.0, %v481
    %v483 = vlaneseq
    %v484 = vshrl.u32 %v483, 7
    %v485 = vlaneseq
    %v486 = vand.u32 %v485, 127
    %vm487 = vcmp.eq.s32.totalorder %v484, %v486
    %v488 = vsel %vm487, 1, 0
    %v489 = vcvt.s32.f32 %v488
    %v490 = vsub.f32 1.0, %v489
    %v491 = vmul.f32 %v482, %v490
    %v492 = vadd.f32 %v491, %v489
    %493 = vst.msk [vmem:[#allocation6] sm:$0xff] %vm442, %v492
    %v494 = vld [vmem:[#allocation2] sm:$0xff]
    %v495 = vld [vmem:[#allocation2 + $0x8] sm:$0xff]
    %v496 = vld [vmem:[#allocation2 + $0x10] sm:$0xff]
    %v497 = vld [vmem:[#allocation2 + $0x18] sm:$0xff]
    %vm498 = vcmask 261120
    %v500 = vsel %vm498, %v35, 0
    %502 = vmatprep.subr.mxu0 0.0
    %v503 = vand.u32 %v494, 4294901760
    %504 = vmatpush1.msra.mxu0 %v503
    %505 = vmatprep.subr.mxu0 0.0
    %v506 = vand.u32 %v495, 4294901760
    %507 = vmatpush1.msra.mxu0 %v506
    %508 = vmatprep.subr.mxu0 0.0
    %v509 = vand.u32 %v496, 4294901760
    %510 = vmatpush1.msra.mxu0 %v509
    %511 = vmatprep.subr.mxu0 0.0
    %v512 = vand.u32 %v497, 4294901760
    %513 = vmatpush1.msra.mxu0 %v512
    %514 = vmatprep.subr.mxu0 0.0
    %515 = vmatpush1.msra.mxu0 0.0
    %516 = vmatprep.subr.mxu0 0.0
    %517 = vmatpush1.msra.mxu0 0.0
    %518 = vmatprep.subr.mxu0 0.0
    %519 = vmatpush1.msra.mxu0 0.0
    %520 = vmatprep.subr.mxu0 0.0
    %521 = vmatpush1.msra.mxu0 0.0
    %522 = vmatprep.subr.mxu0 0.0
    %523 = vmatpush1.msra.mxu0 0.0
    %524 = vmatprep.subr.mxu0 0.0
    %525 = vmatpush1.msra.mxu0 0.0
    %526 = vmatprep.subr.mxu0 0.0
    %527 = vmatpush1.msra.mxu0 0.0
    %528 = vmatprep.subr.mxu0 0.0
    %529 = vmatpush1.msra.mxu0 0.0
    %530 = vmatprep.subr.mxu0 0.0
    %531 = vmatpush1.msra.mxu0 0.0
    %532 = vmatprep.subr.mxu0 0.0
    %533 = vmatpush1.msra.mxu0 0.0
    %534 = vmatprep.subr.mxu0 0.0
    %535 = vmatpush1.msra.mxu0 0.0
    %536 = vmatprep.subr.mxu0 0.0
    %537 = vmatpush1.msra.mxu0 0.0
    %538 = vmatprep.subr.mxu0 0.0
    %539 = vmatpush1.msra.mxu0 0.0
    %540 = vmatprep.subr.mxu0 0.0
    %541 = vmatpush1.msra.mxu0 0.0
    %542 = vmatprep.subr.mxu0 0.0
    %543 = vmatpush1.msra.mxu0 0.0
    %544 = vmatprep.subr.mxu0 0.0
    %545 = vmatpush1.msra.mxu0 0.0
    %546 = vmatprep.subr.mxu0 0.0
    %547 = vmatpush1.msra.mxu0 0.0
    %548 = vmatprep.subr.mxu0 0.0
    %549 = vmatpush1.msra.mxu0 0.0
    %550 = vmatprep.subr.mxu0 0.0
    %551 = vmatpush1.msra.mxu0 0.0
    %552 = vmatprep.subr.mxu0 0.0
    %553 = vmatpush1.msra.mxu0 0.0
    %554 = vmatprep.subr.mxu0 0.0
    %555 = vmatpush1.msra.mxu0 0.0
    %556 = vmatprep.subr.mxu0 0.0
    %557 = vmatpush1.msra.mxu0 0.0
    %558 = vmatprep.subr.mxu0 0.0
    %559 = vmatpush1.msra.mxu0 0.0
    %560 = vmatprep.subr.mxu0 0.0
    %561 = vmatpush1.msra.mxu0 0.0
    %562 = vmatprep.subr.mxu0 0.0
    %563 = vmatpush1.msra.mxu0 0.0
    %564 = vmatprep.subr.mxu0 0.0
    %565 = vmatpush1.msra.mxu0 0.0
    %566 = vmatprep.subr.mxu0 0.0
    %567 = vmatpush1.msra.mxu0 0.0
    %568 = vmatprep.subr.mxu0 0.0
    %569 = vmatpush1.msra.mxu0 0.0
    %570 = vmatprep.mubr.f32.mxu0 0.0
    %v571 = vand.u32 %v500, 4294901760
    %v572 = vsub.f32 %v500, %v571
    %v573 = vand.u32 %v572, 4294901760
    %v574 = vsub.f32 %v572, %v573
    %v575 = vand.u32 %v574, 4294901760
    %576 = vmatmul.mubr.f32.gmra.mrb[0].mxu0 %v575
    %v577 = vpop.f32.mrb[0].mxu0
    %v578 = vadd.f32 0.0, %v577
    %v579 = vpop.f32.mrb[0].mxu0
    %580 = vdwg.mxu0
    %581 = vmatprep.subr.mxu0 0.0
    %v582 = vand.u32 %v494, 4294901760
    %v583 = vsub.f32 %v494, %v582
    %v584 = vand.u32 %v583, 4294901760
    %v585 = vsub.f32 %v583, %v584
    %v586 = vand.u32 %v585, 4294901760
    %587 = vmatpush1.msra.mxu0 %v586
    %588 = vmatprep.subr.mxu0 0.0
    %v589 = vand.u32 %v495, 4294901760
    %v590 = vsub.f32 %v495, %v589
    %v591 = vand.u32 %v590, 4294901760
    %v592 = vsub.f32 %v590, %v591
    %v593 = vand.u32 %v592, 4294901760
    %594 = vmatpush1.msra.mxu0 %v593
    %595 = vmatprep.subr.mxu0 0.0
    %v596 = vand.u32 %v496, 4294901760
    %v597 = vsub.f32 %v496, %v596
    %v598 = vand.u32 %v597, 4294901760
    %v599 = vsub.f32 %v597, %v598
    %v600 = vand.u32 %v599, 4294901760
    %601 = vmatpush1.msra.mxu0 %v600
    %602 = vmatprep.subr.mxu0 0.0
    %v603 = vand.u32 %v497, 4294901760
    %v604 = vsub.f32 %v497, %v603
    %v605 = vand.u32 %v604, 4294901760
    %v606 = vsub.f32 %v604, %v605
    %v607 = vand.u32 %v606, 4294901760
    %608 = vmatpush1.msra.mxu0 %v607
    %609 = vmatprep.subr.mxu0 0.0
    %610 = vmatpush1.msra.mxu0 0.0
    %611 = vmatprep.subr.mxu0 0.0
    %612 = vmatpush1.msra.mxu0 0.0
    %613 = vmatprep.subr.mxu0 0.0
    %614 = vmatpush1.msra.mxu0 0.0
    %615 = vmatprep.subr.mxu0 0.0
    %616 = vmatpush1.msra.mxu0 0.0
    %617 = vmatprep.subr.mxu0 0.0
    %618 = vmatpush1.msra.mxu0 0.0
    %619 = vmatprep.subr.mxu0 0.0
    %620 = vmatpush1.msra.mxu0 0.0
    %621 = vmatprep.subr.mxu0 0.0
    %622 = vmatpush1.msra.mxu0 0.0
    %623 = vmatprep.subr.mxu0 0.0
    %624 = vmatpush1.msra.mxu0 0.0
    %625 = vmatprep.subr.mxu0 0.0
    %626 = vmatpush1.msra.mxu0 0.0
    %627 = vmatprep.subr.mxu0 0.0
    %628 = vmatpush1.msra.mxu0 0.0
    %629 = vmatprep.subr.mxu0 0.0
    %630 = vmatpush1.msra.mxu0 0.0
    %631 = vmatprep.subr.mxu0 0.0
    %632 = vmatpush1.msra.mxu0 0.0
    %633 = vmatprep.subr.mxu0 0.0
    %634 = vmatpush1.msra.mxu0 0.0
    %635 = vmatprep.subr.mxu0 0.0
    %636 = vmatpush1.msra.mxu0 0.0
    %637 = vmatprep.subr.mxu0 0.0
    %638 = vmatpush1.msra.mxu0 0.0
    %639 = vmatprep.subr.mxu0 0.0
    %640 = vmatpush1.msra.mxu0 0.0
    %641 = vmatprep.subr.mxu0 0.0
    %642 = vmatpush1.msra.mxu0 0.0
    %643 = vmatprep.subr.mxu0 0.0
    %644 = vmatpush1.msra.mxu0 0.0
    %645 = vmatprep.subr.mxu0 0.0
    %646 = vmatpush1.msra.mxu0 0.0
    %647 = vmatprep.subr.mxu0 0.0
    %648 = vmatpush1.msra.mxu0 0.0
    %649 = vmatprep.subr.mxu0 0.0
    %650 = vmatpush1.msra.mxu0 0.0
    %651 = vmatprep.subr.mxu0 0.0
    %652 = vmatpush1.msra.mxu0 0.0
    %653 = vmatprep.subr.mxu0 0.0
    %654 = vmatpush1.msra.mxu0 0.0
    %655 = vmatprep.subr.mxu0 0.0
    %656 = vmatpush1.msra.mxu0 0.0
    %657 = vmatprep.subr.mxu0 0.0
    %658 = vmatpush1.msra.mxu0 0.0
    %659 = vmatprep.subr.mxu0 0.0
    %660 = vmatpush1.msra.mxu0 0.0
    %661 = vmatprep.subr.mxu0 0.0
    %662 = vmatpush1.msra.mxu0 0.0
    %663 = vmatprep.subr.mxu0 0.0
    %664 = vmatpush1.msra.mxu0 0.0
    %665 = vmatprep.mubr.f32.mxu0 0.0
    %v666 = vand.u32 %v500, 4294901760
    %667 = vmatmul.mubr.f32.gmra.mrb[0].mxu0 %v666
    %v668 = vpop.f32.mrb[0].mxu0
    %v669 = vadd.f32 %v578, %v668
    %v670 = vpop.f32.mrb[0].mxu0
    %671 = vdwg.mxu0
    %672 = vmatprep.subr.mxu0 0.0
    %v673 = vand.u32 %v494, 4294901760
    %v674 = vsub.f32 %v494, %v673
    %675 = vmatpush1.msra.mxu0 %v674
    %676 = vmatprep.subr.mxu0 0.0
    %v677 = vand.u32 %v495, 4294901760
    %v678 = vsub.f32 %v495, %v677
    %679 = vmatpush1.msra.mxu0 %v678
    %680 = vmatprep.subr.mxu0 0.0
    %v681 = vand.u32 %v496, 4294901760
    %v682 = vsub.f32 %v496, %v681
    %683 = vmatpush1.msra.mxu0 %v682
    %684 = vmatprep.subr.mxu0 0.0
    %v685 = vand.u32 %v497, 4294901760
    %v686 = vsub.f32 %v497, %v685
    %687 = vmatpush1.msra.mxu0 %v686
    %688 = vmatprep.subr.mxu0 0.0
    %689 = vmatpush1.msra.mxu0 0.0
    %690 = vmatprep.subr.mxu0 0.0
    %691 = vmatpush1.msra.mxu0 0.0
    %692 = vmatprep.subr.mxu0 0.0
    %693 = vmatpush1.msra.mxu0 0.0
    %694 = vmatprep.subr.mxu0 0.0
    %695 = vmatpush1.msra.mxu0 0.0
    %696 = vmatprep.subr.mxu0 0.0
    %697 = vmatpush1.msra.mxu0 0.0
    %698 = vmatprep.subr.mxu0 0.0
    %699 = vmatpush1.msra.mxu0 0.0
    %700 = vmatprep.subr.mxu0 0.0
    %701 = vmatpush1.msra.mxu0 0.0
    %702 = vmatprep.subr.mxu0 0.0
    %703 = vmatpush1.msra.mxu0 0.0
    %704 = vmatprep.subr.mxu0 0.0
    %705 = vmatpush1.msra.mxu0 0.0
    %706 = vmatprep.subr.mxu0 0.0
    %707 = vmatpush1.msra.mxu0 0.0
    %708 = vmatprep.subr.mxu0 0.0
    %709 = vmatpush1.msra.mxu0 0.0
    %710 = vmatprep.subr.mxu0 0.0
    %711 = vmatpush1.msra.mxu0 0.0
    %712 = vmatprep.subr.mxu0 0.0
    %713 = vmatpush1.msra.mxu0 0.0
    %714 = vmatprep.subr.mxu0 0.0
    %715 = vmatpush1.msra.mxu0 0.0
    %716 = vmatprep.subr.mxu0 0.0
    %717 = vmatpush1.msra.mxu0 0.0
    %718 = vmatprep.subr.mxu0 0.0
    %719 = vmatpush1.msra.mxu0 0.0
    %720 = vmatprep.subr.mxu0 0.0
    %721 = vmatpush1.msra.mxu0 0.0
    %722 = vmatprep.subr.mxu0 0.0
    %723 = vmatpush1.msra.mxu0 0.0
    %724 = vmatprep.subr.mxu0 0.0
    %725 = vmatpush1.msra.mxu0 0.0
    %726 = vmatprep.subr.mxu0 0.0
    %727 = vmatpush1.msra.mxu0 0.0
    %728 = vmatprep.subr.mxu0 0.0
    %729 = vmatpush1.msra.mxu0 0.0
    %730 = vmatprep.subr.mxu0 0.0
    %731 = vmatpush1.msra.mxu0 0.0
    %732 = vmatprep.subr.mxu0 0.0
    %733 = vmatpush1.msra.mxu0 0.0
    %734 = vmatprep.subr.mxu0 0.0
    %735 = vmatpush1.msra.mxu0 0.0
    %736 = vmatprep.subr.mxu0 0.0
    %737 = vmatpush1.msra.mxu0 0.0
    %738 = vmatprep.subr.mxu0 0.0
    %739 = vmatpush1.msra.mxu0 0.0
    %740 = vmatprep.subr.mxu0 0.0
    %741 = vmatpush1.msra.mxu0 0.0
    %742 = vmatprep.subr.mxu0 0.0
    %743 = vmatpush1.msra.mxu0 0.0
    %744 = vmatprep.mubr.f32.mxu0 0.0
    %v745 = vand.u32 %v500, 4294901760
    %v746 = vsub.f32 %v500, %v745
    %747 = vmatmul.mubr.f32.gmra.mrb[0].mxu0 %v746
    %v748 = vpop.f32.mrb[0].mxu0
    %v749 = vadd.f32 %v669, %v748
    %v750 = vpop.f32.mrb[0].mxu0
    %751 = vdwg.mxu0
    %752 = vmatprep.subr.mxu0 0.0
    %v753 = vand.u32 %v494, 4294901760
    %754 = vmatpush1.msra.mxu0 %v753
    %755 = vmatprep.subr.mxu0 0.0
    %v756 = vand.u32 %v495, 4294901760
    %757 = vmatpush1.msra.mxu0 %v756
    %758 = vmatprep.subr.mxu0 0.0
    %v759 = vand.u32 %v496, 4294901760
    %760 = vmatpush1.msra.mxu0 %v759
    %761 = vmatprep.subr.mxu0 0.0
    %v762 = vand.u32 %v497, 4294901760
    %763 = vmatpush1.msra.mxu0 %v762
    %764 = vmatprep.subr.mxu0 0.0
    %765 = vmatpush1.msra.mxu0 0.0
    %766 = vmatprep.subr.mxu0 0.0
    %767 = vmatpush1.msra.mxu0 0.0
    %768 = vmatprep.subr.mxu0 0.0
    %769 = vmatpush1.msra.mxu0 0.0
    %770 = vmatprep.subr.mxu0 0.0
    %771 = vmatpush1.msra.mxu0 0.0
    %772 = vmatprep.subr.mxu0 0.0
    %773 = vmatpush1.msra.mxu0 0.0
    %774 = vmatprep.subr.mxu0 0.0
    %775 = vmatpush1.msra.mxu0 0.0
    %776 = vmatprep.subr.mxu0 0.0
    %777 = vmatpush1.msra.mxu0 0.0
    %778 = vmatprep.subr.mxu0 0.0
    %779 = vmatpush1.msra.mxu0 0.0
    %780 = vmatprep.subr.mxu0 0.0
    %781 = vmatpush1.msra.mxu0 0.0
    %782 = vmatprep.subr.mxu0 0.0
    %783 = vmatpush1.msra.mxu0 0.0
    %784 = vmatprep.subr.mxu0 0.0
    %785 = vmatpush1.msra.mxu0 0.0
    %786 = vmatprep.subr.mxu0 0.0
    %787 = vmatpush1.msra.mxu0 0.0
    %788 = vmatprep.subr.mxu0 0.0
    %789 = vmatpush1.msra.mxu0 0.0
    %790 = vmatprep.subr.mxu0 0.0
    %791 = vmatpush1.msra.mxu0 0.0
    %792 = vmatprep.subr.mxu0 0.0
    %793 = vmatpush1.msra.mxu0 0.0
    %794 = vmatprep.subr.mxu0 0.0
    %795 = vmatpush1.msra.mxu0 0.0
    %796 = vmatprep.subr.mxu0 0.0
    %797 = vmatpush1.msra.mxu0 0.0
    %798 = vmatprep.subr.mxu0 0.0
    %799 = vmatpush1.msra.mxu0 0.0
    %800 = vmatprep.subr.mxu0 0.0
    %801 = vmatpush1.msra.mxu0 0.0
    %802 = vmatprep.subr.mxu0 0.0
    %803 = vmatpush1.msra.mxu0 0.0
    %804 = vmatprep.subr.mxu0 0.0
    %805 = vmatpush1.msra.mxu0 0.0
    %806 = vmatprep.subr.mxu0 0.0
    %807 = vmatpush1.msra.mxu0 0.0
    %808 = vmatprep.subr.mxu0 0.0
    %809 = vmatpush1.msra.mxu0 0.0
    %810 = vmatprep.subr.mxu0 0.0
    %811 = vmatpush1.msra.mxu0 0.0
    %812 = vmatprep.subr.mxu0 0.0
    %813 = vmatpush1.msra.mxu0 0.0
    %814 = vmatprep.subr.mxu0 0.0
    %815 = vmatpush1.msra.mxu0 0.0
    %816 = vmatprep.subr.mxu0 0.0
    %817 = vmatpush1.msra.mxu0 0.0
    %818 = vmatprep.subr.mxu0 0.0
    %819 = vmatpush1.msra.mxu0 0.0
    %820 = vmatprep.mubr.f32.mxu0 0.0
    %v821 = vand.u32 %v500, 4294901760
    %v822 = vsub.f32 %v500, %v821
    %v823 = vand.u32 %v822, 4294901760
    %824 = vmatmul.mubr.f32.gmra.mrb[0].mxu0 %v823
    %v825 = vpop.f32.mrb[0].mxu0
    %v826 = vadd.f32 %v749, %v825
    %v827 = vpop.f32.mrb[0].mxu0
    %828 = vdwg.mxu0
    %829 = vmatprep.subr.mxu0 0.0
    %v830 = vand.u32 %v494, 4294901760
    %v831 = vsub.f32 %v494, %v830
    %v832 = vand.u32 %v831, 4294901760
    %833 = vmatpush1.msra.mxu0 %v832
    %834 = vmatprep.subr.mxu0 0.0
    %v835 = vand.u32 %v495, 4294901760
    %v836 = vsub.f32 %v495, %v835
    %v837 = vand.u32 %v836, 4294901760
    %838 = vmatpush1.msra.mxu0 %v837
    %839 = vmatprep.subr.mxu0 0.0
    %v840 = vand.u32 %v496, 4294901760
    %v841 = vsub.f32 %v496, %v840
    %v842 = vand.u32 %v841, 4294901760
    %843 = vmatpush1.msra.mxu0 %v842
    %844 = vmatprep.subr.mxu0 0.0
    %v845 = vand.u32 %v497, 4294901760
    %v846 = vsub.f32 %v497, %v845
    %v847 = vand.u32 %v846, 4294901760
    %848 = vmatpush1.msra.mxu0 %v847
    %849 = vmatprep.subr.mxu0 0.0
    %850 = vmatpush1.msra.mxu0 0.0
    %851 = vmatprep.subr.mxu0 0.0
    %852 = vmatpush1.msra.mxu0 0.0
    %853 = vmatprep.subr.mxu0 0.0
    %854 = vmatpush1.msra.mxu0 0.0
    %855 = vmatprep.subr.mxu0 0.0
    %856 = vmatpush1.msra.mxu0 0.0
    %857 = vmatprep.subr.mxu0 0.0
    %858 = vmatpush1.msra.mxu0 0.0
    %859 = vmatprep.subr.mxu0 0.0
    %860 = vmatpush1.msra.mxu0 0.0
    %861 = vmatprep.subr.mxu0 0.0
    %862 = vmatpush1.msra.mxu0 0.0
    %863 = vmatprep.subr.mxu0 0.0
    %864 = vmatpush1.msra.mxu0 0.0
    %865 = vmatprep.subr.mxu0 0.0
    %866 = vmatpush1.msra.mxu0 0.0
    %867 = vmatprep.subr.mxu0 0.0
    %868 = vmatpush1.msra.mxu0 0.0
    %869 = vmatprep.subr.mxu0 0.0
    %870 = vmatpush1.msra.mxu0 0.0
    %871 = vmatprep.subr.mxu0 0.0
    %872 = vmatpush1.msra.mxu0 0.0
    %873 = vmatprep.subr.mxu0 0.0
    %874 = vmatpush1.msra.mxu0 0.0
    %875 = vmatprep.subr.mxu0 0.0
    %876 = vmatpush1.msra.mxu0 0.0
    %877 = vmatprep.subr.mxu0 0.0
    %878 = vmatpush1.msra.mxu0 0.0
    %879 = vmatprep.subr.mxu0 0.0
    %880 = vmatpush1.msra.mxu0 0.0
    %881 = vmatprep.subr.mxu0 0.0
    %882 = vmatpush1.msra.mxu0 0.0
    %883 = vmatprep.subr.mxu0 0.0
    %884 = vmatpush1.msra.mxu0 0.0
    %885 = vmatprep.subr.mxu0 0.0
    %886 = vmatpush1.msra.mxu0 0.0
    %887 = vmatprep.subr.mxu0 0.0
    %888 = vmatpush1.msra.mxu0 0.0
    %889 = vmatprep.subr.mxu0 0.0
    %890 = vmatpush1.msra.mxu0 0.0
    %891 = vmatprep.subr.mxu0 0.0
    %892 = vmatpush1.msra.mxu0 0.0
    %893 = vmatprep.subr.mxu0 0.0
    %894 = vmatpush1.msra.mxu0 0.0
    %895 = vmatprep.subr.mxu0 0.0
    %896 = vmatpush1.msra.mxu0 0.0
    %897 = vmatprep.subr.mxu0 0.0
    %898 = vmatpush1.msra.mxu0 0.0
    %899 = vmatprep.subr.mxu0 0.0
    %900 = vmatpush1.msra.mxu0 0.0
    %901 = vmatprep.subr.mxu0 0.0
    %902 = vmatpush1.msra.mxu0 0.0
    %903 = vmatprep.subr.mxu0 0.0
    %904 = vmatpush1.msra.mxu0 0.0
    %905 = vmatprep.mubr.f32.mxu0 0.0
    %v906 = vand.u32 %v500, 4294901760
    %907 = vmatmul.mubr.f32.gmra.mrb[0].mxu0 %v906
    %v908 = vpop.f32.mrb[0].mxu0
    %v909 = vadd.f32 %v826, %v908
    %v910 = vpop.f32.mrb[0].mxu0
    %911 = vdwg.mxu0
    %912 = vmatprep.subr.mxu0 0.0
    %v913 = vand.u32 %v494, 4294901760
    %914 = vmatpush1.msra.mxu0 %v913
    %915 = vmatprep.subr.mxu0 0.0
    %v916 = vand.u32 %v495, 4294901760
    %917 = vmatpush1.msra.mxu0 %v916
    %918 = vmatprep.subr.mxu0 0.0
    %v919 = vand.u32 %v496, 4294901760
    %920 = vmatpush1.msra.mxu0 %v919
    %921 = vmatprep.subr.mxu0 0.0
    %v922 = vand.u32 %v497, 4294901760
    %923 = vmatpush1.msra.mxu0 %v922
    %924 = vmatprep.subr.mxu0 0.0
    %925 = vmatpush1.msra.mxu0 0.0
    %926 = vmatprep.subr.mxu0 0.0
    %927 = vmatpush1.msra.mxu0 0.0
    %928 = vmatprep.subr.mxu0 0.0
    %929 = vmatpush1.msra.mxu0 0.0
    %930 = vmatprep.subr.mxu0 0.0
    %931 = vmatpush1.msra.mxu0 0.0
    %932 = vmatprep.subr.mxu0 0.0
    %933 = vmatpush1.msra.mxu0 0.0
    %934 = vmatprep.subr.mxu0 0.0
    %935 = vmatpush1.msra.mxu0 0.0
    %936 = vmatprep.subr.mxu0 0.0
    %937 = vmatpush1.msra.mxu0 0.0
    %938 = vmatprep.subr.mxu0 0.0
    %939 = vmatpush1.msra.mxu0 0.0
    %940 = vmatprep.subr.mxu0 0.0
    %941 = vmatpush1.msra.mxu0 0.0
    %942 = vmatprep.subr.mxu0 0.0
    %943 = vmatpush1.msra.mxu0 0.0
    %944 = vmatprep.subr.mxu0 0.0
    %945 = vmatpush1.msra.mxu0 0.0
    %946 = vmatprep.subr.mxu0 0.0
    %947 = vmatpush1.msra.mxu0 0.0
    %948 = vmatprep.subr.mxu0 0.0
    %949 = vmatpush1.msra.mxu0 0.0
    %950 = vmatprep.subr.mxu0 0.0
    %951 = vmatpush1.msra.mxu0 0.0
    %952 = vmatprep.subr.mxu0 0.0
    %953 = vmatpush1.msra.mxu0 0.0
    %954 = vmatprep.subr.mxu0 0.0
    %955 = vmatpush1.msra.mxu0 0.0
    %956 = vmatprep.subr.mxu0 0.0
    %957 = vmatpush1.msra.mxu0 0.0
    %958 = vmatprep.subr.mxu0 0.0
    %959 = vmatpush1.msra.mxu0 0.0
    %960 = vmatprep.subr.mxu0 0.0
    %961 = vmatpush1.msra.mxu0 0.0
    %962 = vmatprep.subr.mxu0 0.0
    %963 = vmatpush1.msra.mxu0 0.0
    %964 = vmatprep.subr.mxu0 0.0
    %965 = vmatpush1.msra.mxu0 0.0
    %966 = vmatprep.subr.mxu0 0.0
    %967 = vmatpush1.msra.mxu0 0.0
    %968 = vmatprep.subr.mxu0 0.0
    %969 = vmatpush1.msra.mxu0 0.0
    %970 = vmatprep.subr.mxu0 0.0
    %971 = vmatpush1.msra.mxu0 0.0
    %972 = vmatprep.subr.mxu0 0.0
    %973 = vmatpush1.msra.mxu0 0.0
    %974 = vmatprep.subr.mxu0 0.0
    %975 = vmatpush1.msra.mxu0 0.0
    %976 = vmatprep.subr.mxu0 0.0
    %977 = vmatpush1.msra.mxu0 0.0
    %978 = vmatprep.subr.mxu0 0.0
    %979 = vmatpush1.msra.mxu0 0.0
    %980 = vmatprep.mubr.f32.mxu0 0.0
    %v981 = vand.u32 %v500, 4294901760
    %982 = vmatmul.mubr.f32.gmra.mrb[0].mxu0 %v981
    %v983 = vpop.f32.mrb[0].mxu0
    %v984 = vadd.f32 %v909, %v983
    %v985 = vpop.f32.mrb[0].mxu0
    %986 = vdwg.mxu0
    %988 = vset.pattern.permute.xlu0 32
    %989 = vperm.xlu0 %988, %v984
    %v990 = vpop.permute.xlu0 %989
    %992 = vset.pattern.permute.xlu0 33
    %993 = vperm.xlu0 %992, %v984
    %v994 = vpop.permute.xlu0 %993
    %v995 = vlaneseq
    %v996 = vshrl.u32 %v995, 7
    %v997 = vsub.s32 %v486, %v996
    %v998 = vrot.slane %v994, %v997
    %vm999 = vcmask 1042434
    %v1000 = vsel %vm999, %v998, %v998
    %vm1001 = vcmask 1043459
    %v1002 = vsel %vm1001, %v998, %v1000
    %vm1003 = vcmask 1044484
    %v1004 = vsel %vm1003, %v998, %v1002
    %vm1005 = vcmask 1045509
    %v1006 = vsel %vm1005, %v998, %v1004
    %vm1007 = vcmask 1046534
    %v1008 = vsel %vm1007, %v998, %v1006
    %vm1009 = vcmask 1047559
    %v1010 = vsel %vm1009, %v998, %v1008
    %v1012 = vmul.f32 %v990, %v1010
    %vm1013 = vcmp.gt.f32.partialorder %v1012, 0.0
    %v1014 = vmul.f32 %v1012, 0.2
    %v1015 = vsel %vm1013, %v1012, %v1014
    %vm1016 = vcmp.gt.f32.partialorder %v492, 0.01
    %v1017 = vsel %vm1016, %v1015, -9e+15
    %v1018 = vsel %vm442, %v1017, -inf
    %1019 = vmax.xlane.f32.xlu0 %v1018
    %v1020 = vpop.xlane.xlu0 %1019
    %v1021 = vsub.f32 %v1017, %v1020
    %v1022 = vmul.f32 %v1021, 1.442695
    %v1023 = vpow.pop %v1022
    %v1024 = vsel %vm442, %v1023, 0.0
    %1025 = vadd.xlane.f32.xlu0 %v1024
    %v1026 = vpop.xlane.xlu0 %1025
    %v1027 = vrcp.pop %v1026
    %v1028 = vmul.f32 %v1023, %v1027
    %v1030 = vsel %vm442, %v1028, 0
    %1032 = vmatprep.subr.mxu0 0.0
    %v1033 = vand.u32 %v984, 4294901760
    %1034 = vmatpush1.msra.mxu0 %v1033
    %1035 = vmatprep.subr.mxu0 0.0
    %1036 = vmatpush1.msra.mxu0 0.0
    %1037 = vmatprep.subr.mxu0 0.0
    %1038 = vmatpush1.msra.mxu0 0.0
    %1039 = vmatprep.subr.mxu0 0.0
    %1040 = vmatpush1.msra.mxu0 0.0
    %1041 = vmatprep.subr.mxu0 0.0
    %1042 = vmatpush1.msra.mxu0 0.0
    %1043 = vmatprep.subr.mxu0 0.0
    %1044 = vmatpush1.msra.mxu0 0.0
    %1045 = vmatprep.subr.mxu0 0.0
    %1046 = vmatpush1.msra.mxu0 0.0
    %1047 = vmatprep.subr.mxu0 0.0
    %1048 = vmatpush1.msra.mxu0 0.0
    %1049 = vmatprep.subr.mxu0 0.0
    %1050 = vmatpush1.msra.mxu0 0.0
    %1051 = vmatprep.subr.mxu0 0.0
    %1052 = vmatpush1.msra.mxu0 0.0
    %1053 = vmatprep.subr.mxu0 0.0
    %1054 = vmatpush1.msra.mxu0 0.0
    %1055 = vmatprep.subr.mxu0 0.0
    %1056 = vmatpush1.msra.mxu0 0.0
    %1057 = vmatprep.subr.mxu0 0.0
    %1058 = vmatpush1.msra.mxu0 0.0
    %1059 = vmatprep.subr.mxu0 0.0
    %1060 = vmatpush1.msra.mxu0 0.0
    %1061 = vmatprep.subr.mxu0 0.0
    %1062 = vmatpush1.msra.mxu0 0.0
    %1063 = vmatprep.subr.mxu0 0.0
    %1064 = vmatpush1.msra.mxu0 0.0
    %1065 = vmatprep.subr.mxu0 0.0
    %1066 = vmatpush1.msra.mxu0 0.0
    %1067 = vmatprep.subr.mxu0 0.0
    %1068 = vmatpush1.msra.mxu0 0.0
    %1069 = vmatprep.subr.mxu0 0.0
    %1070 = vmatpush1.msra.mxu0 0.0
    %1071 = vmatprep.subr.mxu0 0.0
    %1072 = vmatpush1.msra.mxu0 0.0
    %1073 = vmatprep.subr.mxu0 0.0
    %1074 = vmatpush1.msra.mxu0 0.0
    %1075 = vmatprep.subr.mxu0 0.0
    %1076 = vmatpush1.msra.mxu0 0.0
    %1077 = vmatprep.subr.mxu0 0.0
    %1078 = vmatpush1.msra.mxu0 0.0
    %1079 = vmatprep.subr.mxu0 0.0
    %1080 = vmatpush1.msra.mxu0 0.0
    %1081 = vmatprep.subr.mxu0 0.0
    %1082 = vmatpush1.msra.mxu0 0.0
    %1083 = vmatprep.subr.mxu0 0.0
    %1084 = vmatpush1.msra.mxu0 0.0
    %1085 = vmatprep.subr.mxu0 0.0
    %1086 = vmatpush1.msra.mxu0 0.0
    %1087 = vmatprep.subr.mxu0 0.0
    %1088 = vmatpush1.msra.mxu0 0.0
    %1089 = vmatprep.subr.mxu0 0.0
    %1090 = vmatpush1.msra.mxu0 0.0
    %1091 = vmatprep.subr.mxu0 0.0
    %1092 = vmatpush1.msra.mxu0 0.0
    %1093 = vmatprep.subr.mxu0 0.0
    %1094 = vmatpush1.msra.mxu0 0.0
    %1095 = vmatprep.subr.mxu0 0.0
    %1096 = vmatpush1.msra.mxu0 0.0
    %1097 = vmatprep.mubr.f32.mxu0 0.0
    %v1098 = vand.u32 %v1030, 4294901760
    %v1099 = vsub.f32 %v1030, %v1098
    %v1100 = vand.u32 %v1099, 4294901760
    %v1101 = vsub.f32 %v1099, %v1100
    %v1102 = vand.u32 %v1101, 4294901760
    %1103 = vmatmul.mubr.f32.gmra.mrb[0].mxu0 %v1102
    %v1104 = vpop.f32.mrb[0].mxu0
    %v1105 = vadd.f32 0.0, %v1104
    %v1106 = vpop.f32.mrb[0].mxu0
    %1107 = vdwg.mxu0
    %1108 = vmatprep.subr.mxu0 0.0
    %v1109 = vand.u32 %v984, 4294901760
    %v1110 = vsub.f32 %v984, %v1109
    %v1111 = vand.u32 %v1110, 4294901760
    %v1112 = vsub.f32 %v1110, %v1111
    %v1113 = vand.u32 %v1112, 4294901760
    %1114 = vmatpush1.msra.mxu0 %v1113
    %1115 = vmatprep.subr.mxu0 0.0
    %1116 = vmatpush1.msra.mxu0 0.0
    %1117 = vmatprep.subr.mxu0 0.0
    %1118 = vmatpush1.msra.mxu0 0.0
    %1119 = vmatprep.subr.mxu0 0.0
    %1120 = vmatpush1.msra.mxu0 0.0
    %1121 = vmatprep.subr.mxu0 0.0
    %1122 = vmatpush1.msra.mxu0 0.0
    %1123 = vmatprep.subr.mxu0 0.0
    %1124 = vmatpush1.msra.mxu0 0.0
    %1125 = vmatprep.subr.mxu0 0.0
    %1126 = vmatpush1.msra.mxu0 0.0
    %1127 = vmatprep.subr.mxu0 0.0
    %1128 = vmatpush1.msra.mxu0 0.0
    %1129 = vmatprep.subr.mxu0 0.0
    %1130 = vmatpush1.msra.mxu0 0.0
    %1131 = vmatprep.subr.mxu0 0.0
    %1132 = vmatpush1.msra.mxu0 0.0
    %1133 = vmatprep.subr.mxu0 0.0
    %1134 = vmatpush1.msra.mxu0 0.0
    %1135 = vmatprep.subr.mxu0 0.0
    %1136 = vmatpush1.msra.mxu0 0.0
    %1137 = vmatprep.subr.mxu0 0.0
    %1138 = vmatpush1.msra.mxu0 0.0
    %1139 = vmatprep.subr.mxu0 0.0
    %1140 = vmatpush1.msra.mxu0 0.0
    %1141 = vmatprep.subr.mxu0 0.0
    %1142 = vmatpush1.msra.mxu0 0.0
    %1143 = vmatprep.subr.mxu0 0.0
    %1144 = vmatpush1.msra.mxu0 0.0
    %1145 = vmatprep.subr.mxu0 0.0
    %1146 = vmatpush1.msra.mxu0 0.0
    %1147 = vmatprep.subr.mxu0 0.0
    %1148 = vmatpush1.msra.mxu0 0.0
    %1149 = vmatprep.subr.mxu0 0.0
    %1150 = vmatpush1.msra.mxu0 0.0
    %1151 = vmatprep.subr.mxu0 0.0
    %1152 = vmatpush1.msra.mxu0 0.0
    %1153 = vmatprep.subr.mxu0 0.0
    %1154 = vmatpush1.msra.mxu0 0.0
    %1155 = vmatprep.subr.mxu0 0.0
    %1156 = vmatpush1.msra.mxu0 0.0
    %1157 = vmatprep.subr.mxu0 0.0
    %1158 = vmatpush1.msra.mxu0 0.0
    %1159 = vmatprep.subr.mxu0 0.0
    %1160 = vmatpush1.msra.mxu0 0.0
    %1161 = vmatprep.subr.mxu0 0.0
    %1162 = vmatpush1.msra.mxu0 0.0
    %1163 = vmatprep.subr.mxu0 0.0
    %1164 = vmatpush1.msra.mxu0 0.0
    %1165 = vmatprep.subr.mxu0 0.0
    %1166 = vmatpush1.msra.mxu0 0.0
    %1167 = vmatprep.subr.mxu0 0.0
    %1168 = vmatpush1.msra.mxu0 0.0
    %1169 = vmatprep.subr.mxu0 0.0
    %1170 = vmatpush1.msra.mxu0 0.0
    %1171 = vmatprep.subr.mxu0 0.0
    %1172 = vmatpush1.msra.mxu0 0.0
    %1173 = vmatprep.subr.mxu0 0.0
    %1174 = vmatpush1.msra.mxu0 0.0
    %1175 = vmatprep.subr.mxu0 0.0
    %1176 = vmatpush1.msra.mxu0 0.0
    %1177 = vmatprep.mubr.f32.mxu0 0.0
    %v1178 = vand.u32 %v1030, 4294901760
    %1179 = vmatmul.mubr.f32.gmra.mrb[0].mxu0 %v1178
    %v1180 = vpop.f32.mrb[0].mxu0
    %v1181 = vadd.f32 %v1105, %v1180
    %v1182 = vpop.f32.mrb[0].mxu0
    %1183 = vdwg.mxu0
    %1184 = vmatprep.subr.mxu0 0.0
    %v1185 = vand.u32 %v984, 4294901760
    %v1186 = vsub.f32 %v984, %v1185
    %1187 = vmatpush1.msra.mxu0 %v1186
    %1188 = vmatprep.subr.mxu0 0.0
    %1189 = vmatpush1.msra.mxu0 0.0
    %1190 = vmatprep.subr.mxu0 0.0
    %1191 = vmatpush1.msra.mxu0 0.0
    %1192 = vmatprep.subr.mxu0 0.0
    %1193 = vmatpush1.msra.mxu0 0.0
    %1194 = vmatprep.subr.mxu0 0.0
    %1195 = vmatpush1.msra.mxu0 0.0
    %1196 = vmatprep.subr.mxu0 0.0
    %1197 = vmatpush1.msra.mxu0 0.0
    %1198 = vmatprep.subr.mxu0 0.0
    %1199 = vmatpush1.msra.mxu0 0.0
    %1200 = vmatprep.subr.mxu0 0.0
    %1201 = vmatpush1.msra.mxu0 0.0
    %1202 = vmatprep.subr.mxu0 0.0
    %1203 = vmatpush1.msra.mxu0 0.0
    %1204 = vmatprep.subr.mxu0 0.0
    %1205 = vmatpush1.msra.mxu0 0.0
    %1206 = vmatprep.subr.mxu0 0.0
    %1207 = vmatpush1.msra.mxu0 0.0
    %1208 = vmatprep.subr.mxu0 0.0
    %1209 = vmatpush1.msra.mxu0 0.0
    %1210 = vmatprep.subr.mxu0 0.0
    %1211 = vmatpush1.msra.mxu0 0.0
    %1212 = vmatprep.subr.mxu0 0.0
    %1213 = vmatpush1.msra.mxu0 0.0
    %1214 = vmatprep.subr.mxu0 0.0
    %1215 = vmatpush1.msra.mxu0 0.0
    %1216 = vmatprep.subr.mxu0 0.0
    %1217 = vmatpush1.msra.mxu0 0.0
    %1218 = vmatprep.subr.mxu0 0.0
    %1219 = vmatpush1.msra.mxu0 0.0
    %1220 = vmatprep.subr.mxu0 0.0
    %1221 = vmatpush1.msra.mxu0 0.0
    %1222 = vmatprep.subr.mxu0 0.0
    %1223 = vmatpush1.msra.mxu0 0.0
    %1224 = vmatprep.subr.mxu0 0.0
    %1225 = vmatpush1.msra.mxu0 0.0
    %1226 = vmatprep.subr.mxu0 0.0
    %1227 = vmatpush1.msra.mxu0 0.0
    %1228 = vmatprep.subr.mxu0 0.0
    %1229 = vmatpush1.msra.mxu0 0.0
    %1230 = vmatprep.subr.mxu0 0.0
    %1231 = vmatpush1.msra.mxu0 0.0
    %1232 = vmatprep.subr.mxu0 0.0
    %1233 = vmatpush1.msra.mxu0 0.0
    %1234 = vmatprep.subr.mxu0 0.0
    %1235 = vmatpush1.msra.mxu0 0.0
    %1236 = vmatprep.subr.mxu0 0.0
    %1237 = vmatpush1.msra.mxu0 0.0
    %1238 = vmatprep.subr.mxu0 0.0
    %1239 = vmatpush1.msra.mxu0 0.0
    %1240 = vmatprep.subr.mxu0 0.0
    %1241 = vmatpush1.msra.mxu0 0.0
    %1242 = vmatprep.subr.mxu0 0.0
    %1243 = vmatpush1.msra.mxu0 0.0
    %1244 = vmatprep.subr.mxu0 0.0
    %1245 = vmatpush1.msra.mxu0 0.0
    %1246 = vmatprep.subr.mxu0 0.0
    %1247 = vmatpush1.msra.mxu0 0.0
    %1248 = vmatprep.subr.mxu0 0.0
    %1249 = vmatpush1.msra.mxu0 0.0
    %1250 = vmatprep.mubr.f32.mxu0 0.0
    %v1251 = vand.u32 %v1030, 4294901760
    %v1252 = vsub.f32 %v1030, %v1251
    %1253 = vmatmul.mubr.f32.gmra.mrb[0].mxu0 %v1252
    %v1254 = vpop.f32.mrb[0].mxu0
    %v1255 = vadd.f32 %v1181, %v1254
    %v1256 = vpop.f32.mrb[0].mxu0
    %1257 = vdwg.mxu0
    %1258 = vmatprep.subr.mxu0 0.0
    %v1259 = vand.u32 %v984, 4294901760
    %1260 = vmatpush1.msra.mxu0 %v1259
    %1261 = vmatprep.subr.mxu0 0.0
    %1262 = vmatpush1.msra.mxu0 0.0
    %1263 = vmatprep.subr.mxu0 0.0
    %1264 = vmatpush1.msra.mxu0 0.0
    %1265 = vmatprep.subr.mxu0 0.0
    %1266 = vmatpush1.msra.mxu0 0.0
    %1267 = vmatprep.subr.mxu0 0.0
    %1268 = vmatpush1.msra.mxu0 0.0
    %1269 = vmatprep.subr.mxu0 0.0
    %1270 = vmatpush1.msra.mxu0 0.0
    %1271 = vmatprep.subr.mxu0 0.0
    %1272 = vmatpush1.msra.mxu0 0.0
    %1273 = vmatprep.subr.mxu0 0.0
    %1274 = vmatpush1.msra.mxu0 0.0
    %1275 = vmatprep.subr.mxu0 0.0
    %1276 = vmatpush1.msra.mxu0 0.0
    %1277 = vmatprep.subr.mxu0 0.0
    %1278 = vmatpush1.msra.mxu0 0.0
    %1279 = vmatprep.subr.mxu0 0.0
    %1280 = vmatpush1.msra.mxu0 0.0
    %1281 = vmatprep.subr.mxu0 0.0
    %1282 = vmatpush1.msra.mxu0 0.0
    %1283 = vmatprep.subr.mxu0 0.0
    %1284 = vmatpush1.msra.mxu0 0.0
    %1285 = vmatprep.subr.mxu0 0.0
    %1286 = vmatpush1.msra.mxu0 0.0
    %1287 = vmatprep.subr.mxu0 0.0
    %1288 = vmatpush1.msra.mxu0 0.0
    %1289 = vmatprep.subr.mxu0 0.0
    %1290 = vmatpush1.msra.mxu0 0.0
    %1291 = vmatprep.subr.mxu0 0.0
    %1292 = vmatpush1.msra.mxu0 0.0
    %1293 = vmatprep.subr.mxu0 0.0
    %1294 = vmatpush1.msra.mxu0 0.0
    %1295 = vmatprep.subr.mxu0 0.0
    %1296 = vmatpush1.msra.mxu0 0.0
    %1297 = vmatprep.subr.mxu0 0.0
    %1298 = vmatpush1.msra.mxu0 0.0
    %1299 = vmatprep.subr.mxu0 0.0
    %1300 = vmatpush1.msra.mxu0 0.0
    %1301 = vmatprep.subr.mxu0 0.0
    %1302 = vmatpush1.msra.mxu0 0.0
    %1303 = vmatprep.subr.mxu0 0.0
    %1304 = vmatpush1.msra.mxu0 0.0
    %1305 = vmatprep.subr.mxu0 0.0
    %1306 = vmatpush1.msra.mxu0 0.0
    %1307 = vmatprep.subr.mxu0 0.0
    %1308 = vmatpush1.msra.mxu0 0.0
    %1309 = vmatprep.subr.mxu0 0.0
    %1310 = vmatpush1.msra.mxu0 0.0
    %1311 = vmatprep.subr.mxu0 0.0
    %1312 = vmatpush1.msra.mxu0 0.0
    %1313 = vmatprep.subr.mxu0 0.0
    %1314 = vmatpush1.msra.mxu0 0.0
    %1315 = vmatprep.subr.mxu0 0.0
    %1316 = vmatpush1.msra.mxu0 0.0
    %1317 = vmatprep.subr.mxu0 0.0
    %1318 = vmatpush1.msra.mxu0 0.0
    %1319 = vmatprep.subr.mxu0 0.0
    %1320 = vmatpush1.msra.mxu0 0.0
    %1321 = vmatprep.subr.mxu0 0.0
    %1322 = vmatpush1.msra.mxu0 0.0
    %1323 = vmatprep.mubr.f32.mxu0 0.0
    %v1324 = vand.u32 %v1030, 4294901760
    %v1325 = vsub.f32 %v1030, %v1324
    %v1326 = vand.u32 %v1325, 4294901760
    %1327 = vmatmul.mubr.f32.gmra.mrb[0].mxu0 %v1326
    %v1328 = vpop.f32.mrb[0].mxu0
    %v1329 = vadd.f32 %v1255, %v1328
    %v1330 = vpop.f32.mrb[0].mxu0
    %1331 = vdwg.mxu0
    %1332 = vmatprep.subr.mxu0 0.0
    %v1333 = vand.u32 %v984, 4294901760
    %v1334 = vsub.f32 %v984, %v1333
    %v1335 = vand.u32 %v1334, 4294901760
    %1336 = vmatpush1.msra.mxu0 %v1335
    %1337 = vmatprep.subr.mxu0 0.0
    %1338 = vmatpush1.msra.mxu0 0.0
    %1339 = vmatprep.subr.mxu0 0.0
    %1340 = vmatpush1.msra.mxu0 0.0
    %1341 = vmatprep.subr.mxu0 0.0
    %1342 = vmatpush1.msra.mxu0 0.0
    %1343 = vmatprep.subr.mxu0 0.0
    %1344 = vmatpush1.msra.mxu0 0.0
    %1345 = vmatprep.subr.mxu0 0.0
    %1346 = vmatpush1.msra.mxu0 0.0
    %1347 = vmatprep.subr.mxu0 0.0
    %1348 = vmatpush1.msra.mxu0 0.0
    %1349 = vmatprep.subr.mxu0 0.0
    %1350 = vmatpush1.msra.mxu0 0.0
    %1351 = vmatprep.subr.mxu0 0.0
    %1352 = vmatpush1.msra.mxu0 0.0
    %1353 = vmatprep.subr.mxu0 0.0
    %1354 = vmatpush1.msra.mxu0 0.0
    %1355 = vmatprep.subr.mxu0 0.0
    %1356 = vmatpush1.msra.mxu0 0.0
    %1357 = vmatprep.subr.mxu0 0.0
    %1358 = vmatpush1.msra.mxu0 0.0
    %1359 = vmatprep.subr.mxu0 0.0
    %1360 = vmatpush1.msra.mxu0 0.0
    %1361 = vmatprep.subr.mxu0 0.0
    %1362 = vmatpush1.msra.mxu0 0.0
    %1363 = vmatprep.subr.mxu0 0.0
    %1364 = vmatpush1.msra.mxu0 0.0
    %1365 = vmatprep.subr.mxu0 0.0
    %1366 = vmatpush1.msra.mxu0 0.0
    %1367 = vmatprep.subr.mxu0 0.0
    %1368 = vmatpush1.msra.mxu0 0.0
    %1369 = vmatprep.subr.mxu0 0.0
    %1370 = vmatpush1.msra.mxu0 0.0
    %1371 = vmatprep.subr.mxu0 0.0
    %1372 = vmatpush1.msra.mxu0 0.0
    %1373 = vmatprep.subr.mxu0 0.0
    %1374 = vmatpush1.msra.mxu0 0.0
    %1375 = vmatprep.subr.mxu0 0.0
    %1376 = vmatpush1.msra.mxu0 0.0
    %1377 = vmatprep.subr.mxu0 0.0
    %1378 = vmatpush1.msra.mxu0 0.0
    %1379 = vmatprep.subr.mxu0 0.0
    %1380 = vmatpush1.msra.mxu0 0.0
    %1381 = vmatprep.subr.mxu0 0.0
    %1382 = vmatpush1.msra.mxu0 0.0
    %1383 = vmatprep.subr.mxu0 0.0
    %1384 = vmatpush1.msra.mxu0 0.0
    %1385 = vmatprep.subr.mxu0 0.0
    %1386 = vmatpush1.msra.mxu0 0.0
    %1387 = vmatprep.subr.mxu0 0.0
    %1388 = vmatpush1.msra.mxu0 0.0
    %1389 = vmatprep.subr.mxu0 0.0
    %1390 = vmatpush1.msra.mxu0 0.0
    %1391 = vmatprep.subr.mxu0 0.0
    %1392 = vmatpush1.msra.mxu0 0.0
    %1393 = vmatprep.subr.mxu0 0.0
    %1394 = vmatpush1.msra.mxu0 0.0
    %1395 = vmatprep.subr.mxu0 0.0
    %1396 = vmatpush1.msra.mxu0 0.0
    %1397 = vmatprep.subr.mxu0 0.0
    %1398 = vmatpush1.msra.mxu0 0.0
    %1399 = vmatprep.mubr.f32.mxu0 0.0
    %v1400 = vand.u32 %v1030, 4294901760
    %1401 = vmatmul.mubr.f32.gmra.mrb[0].mxu0 %v1400
    %v1402 = vpop.f32.mrb[0].mxu0
    %v1403 = vadd.f32 %v1329, %v1402
    %v1404 = vpop.f32.mrb[0].mxu0
    %1405 = vdwg.mxu0
    %1406 = vmatprep.subr.mxu0 0.0
    %v1407 = vand.u32 %v984, 4294901760
    %1408 = vmatpush1.msra.mxu0 %v1407
    %1409 = vmatprep.subr.mxu0 0.0
    %1410 = vmatpush1.msra.mxu0 0.0
    %1411 = vmatprep.subr.mxu0 0.0
    %1412 = vmatpush1.msra.mxu0 0.0
    %1413 = vmatprep.subr.mxu0 0.0
    %1414 = vmatpush1.msra.mxu0 0.0
    %1415 = vmatprep.subr.mxu0 0.0
    %1416 = vmatpush1.msra.mxu0 0.0
    %1417 = vmatprep.subr.mxu0 0.0
    %1418 = vmatpush1.msra.mxu0 0.0
    %1419 = vmatprep.subr.mxu0 0.0
    %1420 = vmatpush1.msra.mxu0 0.0
    %1421 = vmatprep.subr.mxu0 0.0
    %1422 = vmatpush1.msra.mxu0 0.0
    %1423 = vmatprep.subr.mxu0 0.0
    %1424 = vmatpush1.msra.mxu0 0.0
    %1425 = vmatprep.subr.mxu0 0.0
    %1426 = vmatpush1.msra.mxu0 0.0
    %1427 = vmatprep.subr.mxu0 0.0
    %1428 = vmatpush1.msra.mxu0 0.0
    %1429 = vmatprep.subr.mxu0 0.0
    %1430 = vmatpush1.msra.mxu0 0.0
    %1431 = vmatprep.subr.mxu0 0.0
    %1432 = vmatpush1.msra.mxu0 0.0
    %1433 = vmatprep.subr.mxu0 0.0
    %1434 = vmatpush1.msra.mxu0 0.0
    %1435 = vmatprep.subr.mxu0 0.0
    %1436 = vmatpush1.msra.mxu0 0.0
    %1437 = vmatprep.subr.mxu0 0.0
    %1438 = vmatpush1.msra.mxu0 0.0
    %1439 = vmatprep.subr.mxu0 0.0
    %1440 = vmatpush1.msra.mxu0 0.0
    %1441 = vmatprep.subr.mxu0 0.0
    %1442 = vmatpush1.msra.mxu0 0.0
    %1443 = vmatprep.subr.mxu0 0.0
    %1444 = vmatpush1.msra.mxu0 0.0
    %1445 = vmatprep.subr.mxu0 0.0
    %1446 = vmatpush1.msra.mxu0 0.0
    %1447 = vmatprep.subr.mxu0 0.0
    %1448 = vmatpush1.msra.mxu0 0.0
    %1449 = vmatprep.subr.mxu0 0.0
    %1450 = vmatpush1.msra.mxu0 0.0
    %1451 = vmatprep.subr.mxu0 0.0
    %1452 = vmatpush1.msra.mxu0 0.0
    %1453 = vmatprep.subr.mxu0 0.0
    %1454 = vmatpush1.msra.mxu0 0.0
    %1455 = vmatprep.subr.mxu0 0.0
    %1456 = vmatpush1.msra.mxu0 0.0
    %1457 = vmatprep.subr.mxu0 0.0
    %1458 = vmatpush1.msra.mxu0 0.0
    %1459 = vmatprep.subr.mxu0 0.0
    %1460 = vmatpush1.msra.mxu0 0.0
    %1461 = vmatprep.subr.mxu0 0.0
    %1462 = vmatpush1.msra.mxu0 0.0
    %1463 = vmatprep.subr.mxu0 0.0
    %1464 = vmatpush1.msra.mxu0 0.0
    %1465 = vmatprep.subr.mxu0 0.0
    %1466 = vmatpush1.msra.mxu0 0.0
    %1467 = vmatprep.subr.mxu0 0.0
    %1468 = vmatpush1.msra.mxu0 0.0
    %1469 = vmatprep.subr.mxu0 0.0
    %1470 = vmatpush1.msra.mxu0 0.0
    %1471 = vmatprep.mubr.f32.mxu0 0.0
    %v1472 = vand.u32 %v1030, 4294901760
    %1473 = vmatmul.mubr.f32.gmra.mrb[0].mxu0 %v1472
    %v1474 = vpop.f32.mrb[0].mxu0
    %v1475 = vadd.f32 %v1403, %v1474
    %v1476 = vpop.f32.mrb[0].mxu0
    %1477 = vdwg.mxu0
    %v1478 = vmax.f32 %v1475, 0.0
    %s1479 = scalar_lea.vmem [#allocation2], 32
    %v1480 = vld [vmem:[%s1479] sm:$0xff]
    %v1481 = vld [vmem:[%s1479 + $0x8] sm:$0xff]
    %v1482 = vld [vmem:[%s1479 + $0x10] sm:$0xff]
    %v1483 = vld [vmem:[%s1479 + $0x18] sm:$0xff]
    %v1485 = vsel %vm498, %v1478, 0
    %1487 = vmatprep.subr.mxu0 0.0
    %v1488 = vand.u32 %v1480, 4294901760
    %1489 = vmatpush1.msra.mxu0 %v1488
    %1490 = vmatprep.subr.mxu0 0.0
    %v1491 = vand.u32 %v1481, 4294901760
    %1492 = vmatpush1.msra.mxu0 %v1491
    %1493 = vmatprep.subr.mxu0 0.0
    %v1494 = vand.u32 %v1482, 4294901760
    %1495 = vmatpush1.msra.mxu0 %v1494
    %1496 = vmatprep.subr.mxu0 0.0
    %v1497 = vand.u32 %v1483, 4294901760
    %1498 = vmatpush1.msra.mxu0 %v1497
    %1499 = vmatprep.subr.mxu0 0.0
    %1500 = vmatpush1.msra.mxu0 0.0
    %1501 = vmatprep.subr.mxu0 0.0
    %1502 = vmatpush1.msra.mxu0 0.0
    %1503 = vmatprep.subr.mxu0 0.0
    %1504 = vmatpush1.msra.mxu0 0.0
    %1505 = vmatprep.subr.mxu0 0.0
    %1506 = vmatpush1.msra.mxu0 0.0
    %1507 = vmatprep.subr.mxu0 0.0
    %1508 = vmatpush1.msra.mxu0 0.0
    %1509 = vmatprep.subr.mxu0 0.0
    %1510 = vmatpush1.msra.mxu0 0.0
    %1511 = vmatprep.subr.mxu0 0.0
    %1512 = vmatpush1.msra.mxu0 0.0
    %1513 = vmatprep.subr.mxu0 0.0
    %1514 = vmatpush1.msra.mxu0 0.0
    %1515 = vmatprep.subr.mxu0 0.0
    %1516 = vmatpush1.msra.mxu0 0.0
    %1517 = vmatprep.subr.mxu0 0.0
    %1518 = vmatpush1.msra.mxu0 0.0
    %1519 = vmatprep.subr.mxu0 0.0
    %1520 = vmatpush1.msra.mxu0 0.0
    %1521 = vmatprep.subr.mxu0 0.0
    %1522 = vmatpush1.msra.mxu0 0.0
    %1523 = vmatprep.subr.mxu0 0.0
    %1524 = vmatpush1.msra.mxu0 0.0
    %1525 = vmatprep.subr.mxu0 0.0
    %1526 = vmatpush1.msra.mxu0 0.0
    %1527 = vmatprep.subr.mxu0 0.0
    %1528 = vmatpush1.msra.mxu0 0.0
    %1529 = vmatprep.subr.mxu0 0.0
    %1530 = vmatpush1.msra.mxu0 0.0
    %1531 = vmatprep.subr.mxu0 0.0
    %1532 = vmatpush1.msra.mxu0 0.0
    %1533 = vmatprep.subr.mxu0 0.0
    %1534 = vmatpush1.msra.mxu0 0.0
    %1535 = vmatprep.subr.mxu0 0.0
    %1536 = vmatpush1.msra.mxu0 0.0
    %1537 = vmatprep.subr.mxu0 0.0
    %1538 = vmatpush1.msra.mxu0 0.0
    %1539 = vmatprep.subr.mxu0 0.0
    %1540 = vmatpush1.msra.mxu0 0.0
    %1541 = vmatprep.subr.mxu0 0.0
    %1542 = vmatpush1.msra.mxu0 0.0
    %1543 = vmatprep.subr.mxu0 0.0
    %1544 = vmatpush1.msra.mxu0 0.0
    %1545 = vmatprep.subr.mxu0 0.0
    %1546 = vmatpush1.msra.mxu0 0.0
    %1547 = vmatprep.subr.mxu0 0.0
    %1548 = vmatpush1.msra.mxu0 0.0
    %1549 = vmatprep.subr.mxu0 0.0
    %1550 = vmatpush1.msra.mxu0 0.0
    %1551 = vmatprep.subr.mxu0 0.0
    %1552 = vmatpush1.msra.mxu0 0.0
    %1553 = vmatprep.subr.mxu0 0.0
    %1554 = vmatpush1.msra.mxu0 0.0
    %1555 = vmatprep.mubr.f32.mxu0 0.0
    %v1556 = vand.u32 %v1485, 4294901760
    %v1557 = vsub.f32 %v1485, %v1556
    %v1558 = vand.u32 %v1557, 4294901760
    %v1559 = vsub.f32 %v1557, %v1558
    %v1560 = vand.u32 %v1559, 4294901760
    %1561 = vmatmul.mubr.f32.gmra.mrb[0].mxu0 %v1560
    %v1562 = vpop.f32.mrb[0].mxu0
    %v1563 = vadd.f32 0.0, %v1562
    %v1564 = vpop.f32.mrb[0].mxu0
    %1565 = vdwg.mxu0
    %1566 = vmatprep.subr.mxu0 0.0
    %v1567 = vand.u32 %v1480, 4294901760
    %v1568 = vsub.f32 %v1480, %v1567
    %v1569 = vand.u32 %v1568, 4294901760
    %v1570 = vsub.f32 %v1568, %v1569
    %v1571 = vand.u32 %v1570, 4294901760
    %1572 = vmatpush1.msra.mxu0 %v1571
    %1573 = vmatprep.subr.mxu0 0.0
    %v1574 = vand.u32 %v1481, 4294901760
    %v1575 = vsub.f32 %v1481, %v1574
    %v1576 = vand.u32 %v1575, 4294901760
    %v1577 = vsub.f32 %v1575, %v1576
    %v1578 = vand.u32 %v1577, 4294901760
    %1579 = vmatpush1.msra.mxu0 %v1578
    %1580 = vmatprep.subr.mxu0 0.0
    %v1581 = vand.u32 %v1482, 4294901760
    %v1582 = vsub.f32 %v1482, %v1581
    %v1583 = vand.u32 %v1582, 4294901760
    %v1584 = vsub.f32 %v1582, %v1583
    %v1585 = vand.u32 %v1584, 4294901760
    %1586 = vmatpush1.msra.mxu0 %v1585
    %1587 = vmatprep.subr.mxu0 0.0
    %v1588 = vand.u32 %v1483, 4294901760
    %v1589 = vsub.f32 %v1483, %v1588
    %v1590 = vand.u32 %v1589, 4294901760
    %v1591 = vsub.f32 %v1589, %v1590
    %v1592 = vand.u32 %v1591, 4294901760
    %1593 = vmatpush1.msra.mxu0 %v1592
    %1594 = vmatprep.subr.mxu0 0.0
    %1595 = vmatpush1.msra.mxu0 0.0
    %1596 = vmatprep.subr.mxu0 0.0
    %1597 = vmatpush1.msra.mxu0 0.0
    %1598 = vmatprep.subr.mxu0 0.0
    %1599 = vmatpush1.msra.mxu0 0.0
    %1600 = vmatprep.subr.mxu0 0.0
    %1601 = vmatpush1.msra.mxu0 0.0
    %1602 = vmatprep.subr.mxu0 0.0
    %1603 = vmatpush1.msra.mxu0 0.0
    %1604 = vmatprep.subr.mxu0 0.0
    %1605 = vmatpush1.msra.mxu0 0.0
    %1606 = vmatprep.subr.mxu0 0.0
    %1607 = vmatpush1.msra.mxu0 0.0
    %1608 = vmatprep.subr.mxu0 0.0
    %1609 = vmatpush1.msra.mxu0 0.0
    %1610 = vmatprep.subr.mxu0 0.0
    %1611 = vmatpush1.msra.mxu0 0.0
    %1612 = vmatprep.subr.mxu0 0.0
    %1613 = vmatpush1.msra.mxu0 0.0
    %1614 = vmatprep.subr.mxu0 0.0
    %1615 = vmatpush1.msra.mxu0 0.0
    %1616 = vmatprep.subr.mxu0 0.0
    %1617 = vmatpush1.msra.mxu0 0.0
    %1618 = vmatprep.subr.mxu0 0.0
    %1619 = vmatpush1.msra.mxu0 0.0
    %1620 = vmatprep.subr.mxu0 0.0
    %1621 = vmatpush1.msra.mxu0 0.0
    %1622 = vmatprep.subr.mxu0 0.0
    %1623 = vmatpush1.msra.mxu0 0.0
    %1624 = vmatprep.subr.mxu0 0.0
    %1625 = vmatpush1.msra.mxu0 0.0
    %1626 = vmatprep.subr.mxu0 0.0
    %1627 = vmatpush1.msra.mxu0 0.0
    %1628 = vmatprep.subr.mxu0 0.0
    %1629 = vmatpush1.msra.mxu0 0.0
    %1630 = vmatprep.subr.mxu0 0.0
    %1631 = vmatpush1.msra.mxu0 0.0
    %1632 = vmatprep.subr.mxu0 0.0
    %1633 = vmatpush1.msra.mxu0 0.0
    %1634 = vmatprep.subr.mxu0 0.0
    %1635 = vmatpush1.msra.mxu0 0.0
    %1636 = vmatprep.subr.mxu0 0.0
    %1637 = vmatpush1.msra.mxu0 0.0
    %1638 = vmatprep.subr.mxu0 0.0
    %1639 = vmatpush1.msra.mxu0 0.0
    %1640 = vmatprep.subr.mxu0 0.0
    %1641 = vmatpush1.msra.mxu0 0.0
    %1642 = vmatprep.subr.mxu0 0.0
    %1643 = vmatpush1.msra.mxu0 0.0
    %1644 = vmatprep.subr.mxu0 0.0
    %1645 = vmatpush1.msra.mxu0 0.0
    %1646 = vmatprep.subr.mxu0 0.0
    %1647 = vmatpush1.msra.mxu0 0.0
    %1648 = vmatprep.subr.mxu0 0.0
    %1649 = vmatpush1.msra.mxu0 0.0
    %1650 = vmatprep.mubr.f32.mxu0 0.0
    %v1651 = vand.u32 %v1485, 4294901760
    %1652 = vmatmul.mubr.f32.gmra.mrb[0].mxu0 %v1651
    %v1653 = vpop.f32.mrb[0].mxu0
    %v1654 = vadd.f32 %v1563, %v1653
    %v1655 = vpop.f32.mrb[0].mxu0
    %1656 = vdwg.mxu0
    %1657 = vmatprep.subr.mxu0 0.0
    %v1658 = vand.u32 %v1480, 4294901760
    %v1659 = vsub.f32 %v1480, %v1658
    %1660 = vmatpush1.msra.mxu0 %v1659
    %1661 = vmatprep.subr.mxu0 0.0
    %v1662 = vand.u32 %v1481, 4294901760
    %v1663 = vsub.f32 %v1481, %v1662
    %1664 = vmatpush1.msra.mxu0 %v1663
    %1665 = vmatprep.subr.mxu0 0.0
    %v1666 = vand.u32 %v1482, 4294901760
    %v1667 = vsub.f32 %v1482, %v1666
    %1668 = vmatpush1.msra.mxu0 %v1667
    %1669 = vmatprep.subr.mxu0 0.0
    %v1670 = vand.u32 %v1483, 4294901760
    %v1671 = vsub.f32 %v1483, %v1670
    %1672 = vmatpush1.msra.mxu0 %v1671
    %1673 = vmatprep.subr.mxu0 0.0
    %1674 = vmatpush1.msra.mxu0 0.0
    %1675 = vmatprep.subr.mxu0 0.0
    %1676 = vmatpush1.msra.mxu0 0.0
    %1677 = vmatprep.subr.mxu0 0.0
    %1678 = vmatpush1.msra.mxu0 0.0
    %1679 = vmatprep.subr.mxu0 0.0
    %1680 = vmatpush1.msra.mxu0 0.0
    %1681 = vmatprep.subr.mxu0 0.0
    %1682 = vmatpush1.msra.mxu0 0.0
    %1683 = vmatprep.subr.mxu0 0.0
    %1684 = vmatpush1.msra.mxu0 0.0
    %1685 = vmatprep.subr.mxu0 0.0
    %1686 = vmatpush1.msra.mxu0 0.0
    %1687 = vmatprep.subr.mxu0 0.0
    %1688 = vmatpush1.msra.mxu0 0.0
    %1689 = vmatprep.subr.mxu0 0.0
    %1690 = vmatpush1.msra.mxu0 0.0
    %1691 = vmatprep.subr.mxu0 0.0
    %1692 = vmatpush1.msra.mxu0 0.0
    %1693 = vmatprep.subr.mxu0 0.0
    %1694 = vmatpush1.msra.mxu0 0.0
    %1695 = vmatprep.subr.mxu0 0.0
    %1696 = vmatpush1.msra.mxu0 0.0
    %1697 = vmatprep.subr.mxu0 0.0
    %1698 = vmatpush1.msra.mxu0 0.0
    %1699 = vmatprep.subr.mxu0 0.0
    %1700 = vmatpush1.msra.mxu0 0.0
    %1701 = vmatprep.subr.mxu0 0.0
    %1702 = vmatpush1.msra.mxu0 0.0
    %1703 = vmatprep.subr.mxu0 0.0
    %1704 = vmatpush1.msra.mxu0 0.0
    %1705 = vmatprep.subr.mxu0 0.0
    %1706 = vmatpush1.msra.mxu0 0.0
    %1707 = vmatprep.subr.mxu0 0.0
    %1708 = vmatpush1.msra.mxu0 0.0
    %1709 = vmatprep.subr.mxu0 0.0
    %1710 = vmatpush1.msra.mxu0 0.0
    %1711 = vmatprep.subr.mxu0 0.0
    %1712 = vmatpush1.msra.mxu0 0.0
    %1713 = vmatprep.subr.mxu0 0.0
    %1714 = vmatpush1.msra.mxu0 0.0
    %1715 = vmatprep.subr.mxu0 0.0
    %1716 = vmatpush1.msra.mxu0 0.0
    %1717 = vmatprep.subr.mxu0 0.0
    %1718 = vmatpush1.msra.mxu0 0.0
    %1719 = vmatprep.subr.mxu0 0.0
    %1720 = vmatpush1.msra.mxu0 0.0
    %1721 = vmatprep.subr.mxu0 0.0
    %1722 = vmatpush1.msra.mxu0 0.0
    %1723 = vmatprep.subr.mxu0 0.0
    %1724 = vmatpush1.msra.mxu0 0.0
    %1725 = vmatprep.subr.mxu0 0.0
    %1726 = vmatpush1.msra.mxu0 0.0
    %1727 = vmatprep.subr.mxu0 0.0
    %1728 = vmatpush1.msra.mxu0 0.0
    %1729 = vmatprep.mubr.f32.mxu0 0.0
    %v1730 = vand.u32 %v1485, 4294901760
    %v1731 = vsub.f32 %v1485, %v1730
    %1732 = vmatmul.mubr.f32.gmra.mrb[0].mxu0 %v1731
    %v1733 = vpop.f32.mrb[0].mxu0
    %v1734 = vadd.f32 %v1654, %v1733
    %v1735 = vpop.f32.mrb[0].mxu0
    %1736 = vdwg.mxu0
    %1737 = vmatprep.subr.mxu0 0.0
    %v1738 = vand.u32 %v1480, 4294901760
    %1739 = vmatpush1.msra.mxu0 %v1738
    %1740 = vmatprep.subr.mxu0 0.0
    %v1741 = vand.u32 %v1481, 4294901760
    %1742 = vmatpush1.msra.mxu0 %v1741
    %1743 = vmatprep.subr.mxu0 0.0
    %v1744 = vand.u32 %v1482, 4294901760
    %1745 = vmatpush1.msra.mxu0 %v1744
    %1746 = vmatprep.subr.mxu0 0.0
    %v1747 = vand.u32 %v1483, 4294901760
    %1748 = vmatpush1.msra.mxu0 %v1747
    %1749 = vmatprep.subr.mxu0 0.0
    %1750 = vmatpush1.msra.mxu0 0.0
    %1751 = vmatprep.subr.mxu0 0.0
    %1752 = vmatpush1.msra.mxu0 0.0
    %1753 = vmatprep.subr.mxu0 0.0
    %1754 = vmatpush1.msra.mxu0 0.0
    %1755 = vmatprep.subr.mxu0 0.0
    %1756 = vmatpush1.msra.mxu0 0.0
    %1757 = vmatprep.subr.mxu0 0.0
    %1758 = vmatpush1.msra.mxu0 0.0
    %1759 = vmatprep.subr.mxu0 0.0
    %1760 = vmatpush1.msra.mxu0 0.0
    %1761 = vmatprep.subr.mxu0 0.0
    %1762 = vmatpush1.msra.mxu0 0.0
    %1763 = vmatprep.subr.mxu0 0.0
    %1764 = vmatpush1.msra.mxu0 0.0
    %1765 = vmatprep.subr.mxu0 0.0
    %1766 = vmatpush1.msra.mxu0 0.0
    %1767 = vmatprep.subr.mxu0 0.0
    %1768 = vmatpush1.msra.mxu0 0.0
    %1769 = vmatprep.subr.mxu0 0.0
    %1770 = vmatpush1.msra.mxu0 0.0
    %1771 = vmatprep.subr.mxu0 0.0
    %1772 = vmatpush1.msra.mxu0 0.0
    %1773 = vmatprep.subr.mxu0 0.0
    %1774 = vmatpush1.msra.mxu0 0.0
    %1775 = vmatprep.subr.mxu0 0.0
    %1776 = vmatpush1.msra.mxu0 0.0
    %1777 = vmatprep.subr.mxu0 0.0
    %1778 = vmatpush1.msra.mxu0 0.0
    %1779 = vmatprep.subr.mxu0 0.0
    %1780 = vmatpush1.msra.mxu0 0.0
    %1781 = vmatprep.subr.mxu0 0.0
    %1782 = vmatpush1.msra.mxu0 0.0
    %1783 = vmatprep.subr.mxu0 0.0
    %1784 = vmatpush1.msra.mxu0 0.0
    %1785 = vmatprep.subr.mxu0 0.0
    %1786 = vmatpush1.msra.mxu0 0.0
    %1787 = vmatprep.subr.mxu0 0.0
    %1788 = vmatpush1.msra.mxu0 0.0
    %1789 = vmatprep.subr.mxu0 0.0
    %1790 = vmatpush1.msra.mxu0 0.0
    %1791 = vmatprep.subr.mxu0 0.0
    %1792 = vmatpush1.msra.mxu0 0.0
    %1793 = vmatprep.subr.mxu0 0.0
    %1794 = vmatpush1.msra.mxu0 0.0
    %1795 = vmatprep.subr.mxu0 0.0
    %1796 = vmatpush1.msra.mxu0 0.0
    %1797 = vmatprep.subr.mxu0 0.0
    %1798 = vmatpush1.msra.mxu0 0.0
    %1799 = vmatprep.subr.mxu0 0.0
    %1800 = vmatpush1.msra.mxu0 0.0
    %1801 = vmatprep.subr.mxu0 0.0
    %1802 = vmatpush1.msra.mxu0 0.0
    %1803 = vmatprep.subr.mxu0 0.0
    %1804 = vmatpush1.msra.mxu0 0.0
    %1805 = vmatprep.mubr.f32.mxu0 0.0
    %v1806 = vand.u32 %v1485, 4294901760
    %v1807 = vsub.f32 %v1485, %v1806
    %v1808 = vand.u32 %v1807, 4294901760
    %1809 = vmatmul.mubr.f32.gmra.mrb[0].mxu0 %v1808
    %v1810 = vpop.f32.mrb[0].mxu0
    %v1811 = vadd.f32 %v1734, %v1810
    %v1812 = vpop.f32.mrb[0].mxu0
    %1813 = vdwg.mxu0
    %1814 = vmatprep.subr.mxu0 0.0
    %v1815 = vand.u32 %v1480, 4294901760
    %v1816 = vsub.f32 %v1480, %v1815
    %v1817 = vand.u32 %v1816, 4294901760
    %1818 = vmatpush1.msra.mxu0 %v1817
    %1819 = vmatprep.subr.mxu0 0.0
    %v1820 = vand.u32 %v1481, 4294901760
    %v1821 = vsub.f32 %v1481, %v1820
    %v1822 = vand.u32 %v1821, 4294901760
    %1823 = vmatpush1.msra.mxu0 %v1822
    %1824 = vmatprep.subr.mxu0 0.0
    %v1825 = vand.u32 %v1482, 4294901760
    %v1826 = vsub.f32 %v1482, %v1825
    %v1827 = vand.u32 %v1826, 4294901760
    %1828 = vmatpush1.msra.mxu0 %v1827
    %1829 = vmatprep.subr.mxu0 0.0
    %v1830 = vand.u32 %v1483, 4294901760
    %v1831 = vsub.f32 %v1483, %v1830
    %v1832 = vand.u32 %v1831, 4294901760
    %1833 = vmatpush1.msra.mxu0 %v1832
    %1834 = vmatprep.subr.mxu0 0.0
    %1835 = vmatpush1.msra.mxu0 0.0
    %1836 = vmatprep.subr.mxu0 0.0
    %1837 = vmatpush1.msra.mxu0 0.0
    %1838 = vmatprep.subr.mxu0 0.0
    %1839 = vmatpush1.msra.mxu0 0.0
    %1840 = vmatprep.subr.mxu0 0.0
    %1841 = vmatpush1.msra.mxu0 0.0
    %1842 = vmatprep.subr.mxu0 0.0
    %1843 = vmatpush1.msra.mxu0 0.0
    %1844 = vmatprep.subr.mxu0 0.0
    %1845 = vmatpush1.msra.mxu0 0.0
    %1846 = vmatprep.subr.mxu0 0.0
    %1847 = vmatpush1.msra.mxu0 0.0
    %1848 = vmatprep.subr.mxu0 0.0
    %1849 = vmatpush1.msra.mxu0 0.0
    %1850 = vmatprep.subr.mxu0 0.0
    %1851 = vmatpush1.msra.mxu0 0.0
    %1852 = vmatprep.subr.mxu0 0.0
    %1853 = vmatpush1.msra.mxu0 0.0
    %1854 = vmatprep.subr.mxu0 0.0
    %1855 = vmatpush1.msra.mxu0 0.0
    %1856 = vmatprep.subr.mxu0 0.0
    %1857 = vmatpush1.msra.mxu0 0.0
    %1858 = vmatprep.subr.mxu0 0.0
    %1859 = vmatpush1.msra.mxu0 0.0
    %1860 = vmatprep.subr.mxu0 0.0
    %1861 = vmatpush1.msra.mxu0 0.0
    %1862 = vmatprep.subr.mxu0 0.0
    %1863 = vmatpush1.msra.mxu0 0.0
    %1864 = vmatprep.subr.mxu0 0.0
    %1865 = vmatpush1.msra.mxu0 0.0
    %1866 = vmatprep.subr.mxu0 0.0
    %1867 = vmatpush1.msra.mxu0 0.0
    %1868 = vmatprep.subr.mxu0 0.0
    %1869 = vmatpush1.msra.mxu0 0.0
    %1870 = vmatprep.subr.mxu0 0.0
    %1871 = vmatpush1.msra.mxu0 0.0
    %1872 = vmatprep.subr.mxu0 0.0
    %1873 = vmatpush1.msra.mxu0 0.0
    %1874 = vmatprep.subr.mxu0 0.0
    %1875 = vmatpush1.msra.mxu0 0.0
    %1876 = vmatprep.subr.mxu0 0.0
    %1877 = vmatpush1.msra.mxu0 0.0
    %1878 = vmatprep.subr.mxu0 0.0
    %1879 = vmatpush1.msra.mxu0 0.0
    %1880 = vmatprep.subr.mxu0 0.0
    %1881 = vmatpush1.msra.mxu0 0.0
    %1882 = vmatprep.subr.mxu0 0.0
    %1883 = vmatpush1.msra.mxu0 0.0
    %1884 = vmatprep.subr.mxu0 0.0
    %1885 = vmatpush1.msra.mxu0 0.0
    %1886 = vmatprep.subr.mxu0 0.0
    %1887 = vmatpush1.msra.mxu0 0.0
    %1888 = vmatprep.subr.mxu0 0.0
    %1889 = vmatpush1.msra.mxu0 0.0
    %1890 = vmatprep.mubr.f32.mxu0 0.0
    %v1891 = vand.u32 %v1485, 4294901760
    %1892 = vmatmul.mubr.f32.gmra.mrb[0].mxu0 %v1891
    %v1893 = vpop.f32.mrb[0].mxu0
    %v1894 = vadd.f32 %v1811, %v1893
    %v1895 = vpop.f32.mrb[0].mxu0
    %1896 = vdwg.mxu0
    %1897 = vmatprep.subr.mxu0 0.0
    %v1898 = vand.u32 %v1480, 4294901760
    %1899 = vmatpush1.msra.mxu0 %v1898
    %1900 = vmatprep.subr.mxu0 0.0
    %v1901 = vand.u32 %v1481, 4294901760
    %1902 = vmatpush1.msra.mxu0 %v1901
    %1903 = vmatprep.subr.mxu0 0.0
    %v1904 = vand.u32 %v1482, 4294901760
    %1905 = vmatpush1.msra.mxu0 %v1904
    %1906 = vmatprep.subr.mxu0 0.0
    %v1907 = vand.u32 %v1483, 4294901760
    %1908 = vmatpush1.msra.mxu0 %v1907
    %1909 = vmatprep.subr.mxu0 0.0
    %1910 = vmatpush1.msra.mxu0 0.0
    %1911 = vmatprep.subr.mxu0 0.0
    %1912 = vmatpush1.msra.mxu0 0.0
    %1913 = vmatprep.subr.mxu0 0.0
    %1914 = vmatpush1.msra.mxu0 0.0
    %1915 = vmatprep.subr.mxu0 0.0
    %1916 = vmatpush1.msra.mxu0 0.0
    %1917 = vmatprep.subr.mxu0 0.0
    %1918 = vmatpush1.msra.mxu0 0.0
    %1919 = vmatprep.subr.mxu0 0.0
    %1920 = vmatpush1.msra.mxu0 0.0
    %1921 = vmatprep.subr.mxu0 0.0
    %1922 = vmatpush1.msra.mxu0 0.0
    %1923 = vmatprep.subr.mxu0 0.0
    %1924 = vmatpush1.msra.mxu0 0.0
    %1925 = vmatprep.subr.mxu0 0.0
    %1926 = vmatpush1.msra.mxu0 0.0
    %1927 = vmatprep.subr.mxu0 0.0
    %1928 = vmatpush1.msra.mxu0 0.0
    %1929 = vmatprep.subr.mxu0 0.0
    %1930 = vmatpush1.msra.mxu0 0.0
    %1931 = vmatprep.subr.mxu0 0.0
    %1932 = vmatpush1.msra.mxu0 0.0
    %1933 = vmatprep.subr.mxu0 0.0
    %1934 = vmatpush1.msra.mxu0 0.0
    %1935 = vmatprep.subr.mxu0 0.0
    %1936 = vmatpush1.msra.mxu0 0.0
    %1937 = vmatprep.subr.mxu0 0.0
    %1938 = vmatpush1.msra.mxu0 0.0
    %1939 = vmatprep.subr.mxu0 0.0
    %1940 = vmatpush1.msra.mxu0 0.0
    %1941 = vmatprep.subr.mxu0 0.0
    %1942 = vmatpush1.msra.mxu0 0.0
    %1943 = vmatprep.subr.mxu0 0.0
    %1944 = vmatpush1.msra.mxu0 0.0
    %1945 = vmatprep.subr.mxu0 0.0
    %1946 = vmatpush1.msra.mxu0 0.0
    %1947 = vmatprep.subr.mxu0 0.0
    %1948 = vmatpush1.msra.mxu0 0.0
    %1949 = vmatprep.subr.mxu0 0.0
    %1950 = vmatpush1.msra.mxu0 0.0
    %1951 = vmatprep.subr.mxu0 0.0
    %1952 = vmatpush1.msra.mxu0 0.0
    %1953 = vmatprep.subr.mxu0 0.0
    %1954 = vmatpush1.msra.mxu0 0.0
    %1955 = vmatprep.subr.mxu0 0.0
    %1956 = vmatpush1.msra.mxu0 0.0
    %1957 = vmatprep.subr.mxu0 0.0
    %1958 = vmatpush1.msra.mxu0 0.0
    %1959 = vmatprep.subr.mxu0 0.0
    %1960 = vmatpush1.msra.mxu0 0.0
    %1961 = vmatprep.subr.mxu0 0.0
    %1962 = vmatpush1.msra.mxu0 0.0
    %1963 = vmatprep.subr.mxu0 0.0
    %1964 = vmatpush1.msra.mxu0 0.0
    %1965 = vmatprep.mubr.f32.mxu0 0.0
    %v1966 = vand.u32 %v1485, 4294901760
    %1967 = vmatmul.mubr.f32.gmra.mrb[0].mxu0 %v1966
    %v1968 = vpop.f32.mrb[0].mxu0
    %v1969 = vadd.f32 %v1894, %v1968
    %v1970 = vpop.f32.mrb[0].mxu0
    %1971 = vdwg.mxu0
    %1973 = vset.pattern.permute.xlu0 32
    %1974 = vperm.xlu0 %1973, %v1969
    %v1975 = vpop.permute.xlu0 %1974
    %1977 = vset.pattern.permute.xlu0 33
    %1978 = vperm.xlu0 %1977, %v1969
    %v1979 = vpop.permute.xlu0 %1978
    %v1980 = vlaneseq
    %v1981 = vshrl.u32 %v1980, 7
    %v1982 = vsub.s32 %v486, %v1981
    %v1983 = vrot.slane %v1979, %v1982
    %v1984 = vsel %vm999, %v1983, %v1983
    %v1985 = vsel %vm1001, %v1983, %v1984
    %v1986 = vsel %vm1003, %v1983, %v1985
    %v1987 = vsel %vm1005, %v1983, %v1986
    %v1988 = vsel %vm1007, %v1983, %v1987
    %v1989 = vsel %vm1009, %v1983, %v1988
    %v1991 = vmul.f32 %v1975, %v1989
    %vm1992 = vcmp.gt.f32.partialorder %v1991, 0.0
    %v1993 = vmul.f32 %v1991, 0.2
    %v1994 = vsel %vm1992, %v1991, %v1993
    %v1995 = vsel %vm1016, %v1994, -9e+15
    %v1996 = vsel %vm442, %v1995, -inf
    %1997 = vmax.xlane.f32.xlu0 %v1996
    %v1998 = vpop.xlane.xlu0 %1997
    %v1999 = vsub.f32 %v1995, %v1998
    %v2000 = vmul.f32 %v1999, 1.442695
    %v2001 = vpow.pop %v2000
    %v2002 = vsel %vm442, %v2001, 0.0
    %2003 = vadd.xlane.f32.xlu0 %v2002
    %v2004 = vpop.xlane.xlu0 %2003
    %v2005 = vrcp.pop %v2004
    %v2006 = vmul.f32 %v2001, %v2005
    %v2008 = vsel %vm442, %v2006, 0
    %2010 = vmatprep.subr.mxu0 0.0
    %v2011 = vand.u32 %v1969, 4294901760
    %2012 = vmatpush1.msra.mxu0 %v2011
    %2013 = vmatprep.subr.mxu0 0.0
    %2014 = vmatpush1.msra.mxu0 0.0
    %2015 = vmatprep.subr.mxu0 0.0
    %2016 = vmatpush1.msra.mxu0 0.0
    %2017 = vmatprep.subr.mxu0 0.0
    %2018 = vmatpush1.msra.mxu0 0.0
    %2019 = vmatprep.subr.mxu0 0.0
    %2020 = vmatpush1.msra.mxu0 0.0
    %2021 = vmatprep.subr.mxu0 0.0
    %2022 = vmatpush1.msra.mxu0 0.0
    %2023 = vmatprep.subr.mxu0 0.0
    %2024 = vmatpush1.msra.mxu0 0.0
    %2025 = vmatprep.subr.mxu0 0.0
    %2026 = vmatpush1.msra.mxu0 0.0
    %2027 = vmatprep.subr.mxu0 0.0
    %2028 = vmatpush1.msra.mxu0 0.0
    %2029 = vmatprep.subr.mxu0 0.0
    %2030 = vmatpush1.msra.mxu0 0.0
    %2031 = vmatprep.subr.mxu0 0.0
    %2032 = vmatpush1.msra.mxu0 0.0
    %2033 = vmatprep.subr.mxu0 0.0
    %2034 = vmatpush1.msra.mxu0 0.0
    %2035 = vmatprep.subr.mxu0 0.0
    %2036 = vmatpush1.msra.mxu0 0.0
    %2037 = vmatprep.subr.mxu0 0.0
    %2038 = vmatpush1.msra.mxu0 0.0
    %2039 = vmatprep.subr.mxu0 0.0
    %2040 = vmatpush1.msra.mxu0 0.0
    %2041 = vmatprep.subr.mxu0 0.0
    %2042 = vmatpush1.msra.mxu0 0.0
    %2043 = vmatprep.subr.mxu0 0.0
    %2044 = vmatpush1.msra.mxu0 0.0
    %2045 = vmatprep.subr.mxu0 0.0
    %2046 = vmatpush1.msra.mxu0 0.0
    %2047 = vmatprep.subr.mxu0 0.0
    %2048 = vmatpush1.msra.mxu0 0.0
    %2049 = vmatprep.subr.mxu0 0.0
    %2050 = vmatpush1.msra.mxu0 0.0
    %2051 = vmatprep.subr.mxu0 0.0
    %2052 = vmatpush1.msra.mxu0 0.0
    %2053 = vmatprep.subr.mxu0 0.0
    %2054 = vmatpush1.msra.mxu0 0.0
    %2055 = vmatprep.subr.mxu0 0.0
    %2056 = vmatpush1.msra.mxu0 0.0
    %2057 = vmatprep.subr.mxu0 0.0
    %2058 = vmatpush1.msra.mxu0 0.0
    %2059 = vmatprep.subr.mxu0 0.0
    %2060 = vmatpush1.msra.mxu0 0.0
    %2061 = vmatprep.subr.mxu0 0.0
    %2062 = vmatpush1.msra.mxu0 0.0
    %2063 = vmatprep.subr.mxu0 0.0
    %2064 = vmatpush1.msra.mxu0 0.0
    %2065 = vmatprep.subr.mxu0 0.0
    %2066 = vmatpush1.msra.mxu0 0.0
    %2067 = vmatprep.subr.mxu0 0.0
    %2068 = vmatpush1.msra.mxu0 0.0
    %2069 = vmatprep.subr.mxu0 0.0
    %2070 = vmatpush1.msra.mxu0 0.0
    %2071 = vmatprep.subr.mxu0 0.0
    %2072 = vmatpush1.msra.mxu0 0.0
    %2073 = vmatprep.subr.mxu0 0.0
    %2074 = vmatpush1.msra.mxu0 0.0
    %2075 = vmatprep.mubr.f32.mxu0 0.0
    %v2076 = vand.u32 %v2008, 4294901760
    %v2077 = vsub.f32 %v2008, %v2076
    %v2078 = vand.u32 %v2077, 4294901760
    %v2079 = vsub.f32 %v2077, %v2078
    %v2080 = vand.u32 %v2079, 4294901760
    %2081 = vmatmul.mubr.f32.gmra.mrb[0].mxu0 %v2080
    %v2082 = vpop.f32.mrb[0].mxu0
    %v2083 = vadd.f32 0.0, %v2082
    %v2084 = vpop.f32.mrb[0].mxu0
    %2085 = vdwg.mxu0
    %2086 = vmatprep.subr.mxu0 0.0
    %v2087 = vand.u32 %v1969, 4294901760
    %v2088 = vsub.f32 %v1969, %v2087
    %v2089 = vand.u32 %v2088, 4294901760
    %v2090 = vsub.f32 %v2088, %v2089
    %v2091 = vand.u32 %v2090, 4294901760
    %2092 = vmatpush1.msra.mxu0 %v2091
    %2093 = vmatprep.subr.mxu0 0.0
    %2094 = vmatpush1.msra.mxu0 0.0
    %2095 = vmatprep.subr.mxu0 0.0
    %2096 = vmatpush1.msra.mxu0 0.0
    %2097 = vmatprep.subr.mxu0 0.0
    %2098 = vmatpush1.msra.mxu0 0.0
    %2099 = vmatprep.subr.mxu0 0.0
    %2100 = vmatpush1.msra.mxu0 0.0
    %2101 = vmatprep.subr.mxu0 0.0
    %2102 = vmatpush1.msra.mxu0 0.0
    %2103 = vmatprep.subr.mxu0 0.0
    %2104 = vmatpush1.msra.mxu0 0.0
    %2105 = vmatprep.subr.mxu0 0.0
    %2106 = vmatpush1.msra.mxu0 0.0
    %2107 = vmatprep.subr.mxu0 0.0
    %2108 = vmatpush1.msra.mxu0 0.0
    %2109 = vmatprep.subr.mxu0 0.0
    %2110 = vmatpush1.msra.mxu0 0.0
    %2111 = vmatprep.subr.mxu0 0.0
    %2112 = vmatpush1.msra.mxu0 0.0
    %2113 = vmatprep.subr.mxu0 0.0
    %2114 = vmatpush1.msra.mxu0 0.0
    %2115 = vmatprep.subr.mxu0 0.0
    %2116 = vmatpush1.msra.mxu0 0.0
    %2117 = vmatprep.subr.mxu0 0.0
    %2118 = vmatpush1.msra.mxu0 0.0
    %2119 = vmatprep.subr.mxu0 0.0
    %2120 = vmatpush1.msra.mxu0 0.0
    %2121 = vmatprep.subr.mxu0 0.0
    %2122 = vmatpush1.msra.mxu0 0.0
    %2123 = vmatprep.subr.mxu0 0.0
    %2124 = vmatpush1.msra.mxu0 0.0
    %2125 = vmatprep.subr.mxu0 0.0
    %2126 = vmatpush1.msra.mxu0 0.0
    %2127 = vmatprep.subr.mxu0 0.0
    %2128 = vmatpush1.msra.mxu0 0.0
    %2129 = vmatprep.subr.mxu0 0.0
    %2130 = vmatpush1.msra.mxu0 0.0
    %2131 = vmatprep.subr.mxu0 0.0
    %2132 = vmatpush1.msra.mxu0 0.0
    %2133 = vmatprep.subr.mxu0 0.0
    %2134 = vmatpush1.msra.mxu0 0.0
    %2135 = vmatprep.subr.mxu0 0.0
    %2136 = vmatpush1.msra.mxu0 0.0
    %2137 = vmatprep.subr.mxu0 0.0
    %2138 = vmatpush1.msra.mxu0 0.0
    %2139 = vmatprep.subr.mxu0 0.0
    %2140 = vmatpush1.msra.mxu0 0.0
    %2141 = vmatprep.subr.mxu0 0.0
    %2142 = vmatpush1.msra.mxu0 0.0
    %2143 = vmatprep.subr.mxu0 0.0
    %2144 = vmatpush1.msra.mxu0 0.0
    %2145 = vmatprep.subr.mxu0 0.0
    %2146 = vmatpush1.msra.mxu0 0.0
    %2147 = vmatprep.subr.mxu0 0.0
    %2148 = vmatpush1.msra.mxu0 0.0
    %2149 = vmatprep.subr.mxu0 0.0
    %2150 = vmatpush1.msra.mxu0 0.0
    %2151 = vmatprep.subr.mxu0 0.0
    %2152 = vmatpush1.msra.mxu0 0.0
    %2153 = vmatprep.subr.mxu0 0.0
    %2154 = vmatpush1.msra.mxu0 0.0
    %2155 = vmatprep.mubr.f32.mxu0 0.0
    %v2156 = vand.u32 %v2008, 4294901760
    %2157 = vmatmul.mubr.f32.gmra.mrb[0].mxu0 %v2156
    %v2158 = vpop.f32.mrb[0].mxu0
    %v2159 = vadd.f32 %v2083, %v2158
    %v2160 = vpop.f32.mrb[0].mxu0
    %2161 = vdwg.mxu0
    %2162 = vmatprep.subr.mxu0 0.0
    %v2163 = vand.u32 %v1969, 4294901760
    %v2164 = vsub.f32 %v1969, %v2163
    %2165 = vmatpush1.msra.mxu0 %v2164
    %2166 = vmatprep.subr.mxu0 0.0
    %2167 = vmatpush1.msra.mxu0 0.0
    %2168 = vmatprep.subr.mxu0 0.0
    %2169 = vmatpush1.msra.mxu0 0.0
    %2170 = vmatprep.subr.mxu0 0.0
    %2171 = vmatpush1.msra.mxu0 0.0
    %2172 = vmatprep.subr.mxu0 0.0
    %2173 = vmatpush1.msra.mxu0 0.0
    %2174 = vmatprep.subr.mxu0 0.0
    %2175 = vmatpush1.msra.mxu0 0.0
    %2176 = vmatprep.subr.mxu0 0.0
    %2177 = vmatpush1.msra.mxu0 0.0
    %2178 = vmatprep.subr.mxu0 0.0
    %2179 = vmatpush1.msra.mxu0 0.0
    %2180 = vmatprep.subr.mxu0 0.0
    %2181 = vmatpush1.msra.mxu0 0.0
    %2182 = vmatprep.subr.mxu0 0.0
    %2183 = vmatpush1.msra.mxu0 0.0
    %2184 = vmatprep.subr.mxu0 0.0
    %2185 = vmatpush1.msra.mxu0 0.0
    %2186 = vmatprep.subr.mxu0 0.0
    %2187 = vmatpush1.msra.mxu0 0.0
    %2188 = vmatprep.subr.mxu0 0.0
    %2189 = vmatpush1.msra.mxu0 0.0
    %2190 = vmatprep.subr.mxu0 0.0
    %2191 = vmatpush1.msra.mxu0 0.0
    %2192 = vmatprep.subr.mxu0 0.0
    %2193 = vmatpush1.msra.mxu0 0.0
    %2194 = vmatprep.subr.mxu0 0.0
    %2195 = vmatpush1.msra.mxu0 0.0
    %2196 = vmatprep.subr.mxu0 0.0
    %2197 = vmatpush1.msra.mxu0 0.0
    %2198 = vmatprep.subr.mxu0 0.0
    %2199 = vmatpush1.msra.mxu0 0.0
    %2200 = vmatprep.subr.mxu0 0.0
    %2201 = vmatpush1.msra.mxu0 0.0
    %2202 = vmatprep.subr.mxu0 0.0
    %2203 = vmatpush1.msra.mxu0 0.0
    %2204 = vmatprep.subr.mxu0 0.0
    %2205 = vmatpush1.msra.mxu0 0.0
    %2206 = vmatprep.subr.mxu0 0.0
    %2207 = vmatpush1.msra.mxu0 0.0
    %2208 = vmatprep.subr.mxu0 0.0
    %2209 = vmatpush1.msra.mxu0 0.0
    %2210 = vmatprep.subr.mxu0 0.0
    %2211 = vmatpush1.msra.mxu0 0.0
    %2212 = vmatprep.subr.mxu0 0.0
    %2213 = vmatpush1.msra.mxu0 0.0
    %2214 = vmatprep.subr.mxu0 0.0
    %2215 = vmatpush1.msra.mxu0 0.0
    %2216 = vmatprep.subr.mxu0 0.0
    %2217 = vmatpush1.msra.mxu0 0.0
    %2218 = vmatprep.subr.mxu0 0.0
    %2219 = vmatpush1.msra.mxu0 0.0
    %2220 = vmatprep.subr.mxu0 0.0
    %2221 = vmatpush1.msra.mxu0 0.0
    %2222 = vmatprep.subr.mxu0 0.0
    %2223 = vmatpush1.msra.mxu0 0.0
    %2224 = vmatprep.subr.mxu0 0.0
    %2225 = vmatpush1.msra.mxu0 0.0
    %2226 = vmatprep.subr.mxu0 0.0
    %2227 = vmatpush1.msra.mxu0 0.0
    %2228 = vmatprep.mubr.f32.mxu0 0.0
    %v2229 = vand.u32 %v2008, 4294901760
    %v2230 = vsub.f32 %v2008, %v2229
    %2231 = vmatmul.mubr.f32.gmra.mrb[0].mxu0 %v2230
    %v2232 = vpop.f32.mrb[0].mxu0
    %v2233 = vadd.f32 %v2159, %v2232
    %v2234 = vpop.f32.mrb[0].mxu0
    %2235 = vdwg.mxu0
    %2236 = vmatprep.subr.mxu0 0.0
    %v2237 = vand.u32 %v1969, 4294901760
    %2238 = vmatpush1.msra.mxu0 %v2237
    %2239 = vmatprep.subr.mxu0 0.0
    %2240 = vmatpush1.msra.mxu0 0.0
    %2241 = vmatprep.subr.mxu0 0.0
    %2242 = vmatpush1.msra.mxu0 0.0
    %2243 = vmatprep.subr.mxu0 0.0
    %2244 = vmatpush1.msra.mxu0 0.0
    %2245 = vmatprep.subr.mxu0 0.0
    %2246 = vmatpush1.msra.mxu0 0.0
    %2247 = vmatprep.subr.mxu0 0.0
    %2248 = vmatpush1.msra.mxu0 0.0
    %2249 = vmatprep.subr.mxu0 0.0
    %2250 = vmatpush1.msra.mxu0 0.0
    %2251 = vmatprep.subr.mxu0 0.0
    %2252 = vmatpush1.msra.mxu0 0.0
    %2253 = vmatprep.subr.mxu0 0.0
    %2254 = vmatpush1.msra.mxu0 0.0
    %2255 = vmatprep.subr.mxu0 0.0
    %2256 = vmatpush1.msra.mxu0 0.0
    %2257 = vmatprep.subr.mxu0 0.0
    %2258 = vmatpush1.msra.mxu0 0.0
    %2259 = vmatprep.subr.mxu0 0.0
    %2260 = vmatpush1.msra.mxu0 0.0
    %2261 = vmatprep.subr.mxu0 0.0
    %2262 = vmatpush1.msra.mxu0 0.0
    %2263 = vmatprep.subr.mxu0 0.0
    %2264 = vmatpush1.msra.mxu0 0.0
    %2265 = vmatprep.subr.mxu0 0.0
    %2266 = vmatpush1.msra.mxu0 0.0
    %2267 = vmatprep.subr.mxu0 0.0
    %2268 = vmatpush1.msra.mxu0 0.0
    %2269 = vmatprep.subr.mxu0 0.0
    %2270 = vmatpush1.msra.mxu0 0.0
    %2271 = vmatprep.subr.mxu0 0.0
    %2272 = vmatpush1.msra.mxu0 0.0
    %2273 = vmatprep.subr.mxu0 0.0
    %2274 = vmatpush1.msra.mxu0 0.0
    %2275 = vmatprep.subr.mxu0 0.0
    %2276 = vmatpush1.msra.mxu0 0.0
    %2277 = vmatprep.subr.mxu0 0.0
    %2278 = vmatpush1.msra.mxu0 0.0
    %2279 = vmatprep.subr.mxu0 0.0
    %2280 = vmatpush1.msra.mxu0 0.0
    %2281 = vmatprep.subr.mxu0 0.0
    %2282 = vmatpush1.msra.mxu0 0.0
    %2283 = vmatprep.subr.mxu0 0.0
    %2284 = vmatpush1.msra.mxu0 0.0
    %2285 = vmatprep.subr.mxu0 0.0
    %2286 = vmatpush1.msra.mxu0 0.0
    %2287 = vmatprep.subr.mxu0 0.0
    %2288 = vmatpush1.msra.mxu0 0.0
    %2289 = vmatprep.subr.mxu0 0.0
    %2290 = vmatpush1.msra.mxu0 0.0
    %2291 = vmatprep.subr.mxu0 0.0
    %2292 = vmatpush1.msra.mxu0 0.0
    %2293 = vmatprep.subr.mxu0 0.0
    %2294 = vmatpush1.msra.mxu0 0.0
    %2295 = vmatprep.subr.mxu0 0.0
    %2296 = vmatpush1.msra.mxu0 0.0
    %2297 = vmatprep.subr.mxu0 0.0
    %2298 = vmatpush1.msra.mxu0 0.0
    %2299 = vmatprep.subr.mxu0 0.0
    %2300 = vmatpush1.msra.mxu0 0.0
    %2301 = vmatprep.mubr.f32.mxu0 0.0
    %v2302 = vand.u32 %v2008, 4294901760
    %v2303 = vsub.f32 %v2008, %v2302
    %v2304 = vand.u32 %v2303, 4294901760
    %2305 = vmatmul.mubr.f32.gmra.mrb[0].mxu0 %v2304
    %v2306 = vpop.f32.mrb[0].mxu0
    %v2307 = vadd.f32 %v2233, %v2306
    %v2308 = vpop.f32.mrb[0].mxu0
    %2309 = vdwg.mxu0
    %2310 = vmatprep.subr.mxu0 0.0
    %v2311 = vand.u32 %v1969, 4294901760
    %v2312 = vsub.f32 %v1969, %v2311
    %v2313 = vand.u32 %v2312, 4294901760
    %2314 = vmatpush1.msra.mxu0 %v2313
    %2315 = vmatprep.subr.mxu0 0.0
    %2316 = vmatpush1.msra.mxu0 0.0
    %2317 = vmatprep.subr.mxu0 0.0
    %2318 = vmatpush1.msra.mxu0 0.0
    %2319 = vmatprep.subr.mxu0 0.0
    %2320 = vmatpush1.msra.mxu0 0.0
    %2321 = vmatprep.subr.mxu0 0.0
    %2322 = vmatpush1.msra.mxu0 0.0
    %2323 = vmatprep.subr.mxu0 0.0
    %2324 = vmatpush1.msra.mxu0 0.0
    %2325 = vmatprep.subr.mxu0 0.0
    %2326 = vmatpush1.msra.mxu0 0.0
    %2327 = vmatprep.subr.mxu0 0.0
    %2328 = vmatpush1.msra.mxu0 0.0
    %2329 = vmatprep.subr.mxu0 0.0
    %2330 = vmatpush1.msra.mxu0 0.0
    %2331 = vmatprep.subr.mxu0 0.0
    %2332 = vmatpush1.msra.mxu0 0.0
    %2333 = vmatprep.subr.mxu0 0.0
    %2334 = vmatpush1.msra.mxu0 0.0
    %2335 = vmatprep.subr.mxu0 0.0
    %2336 = vmatpush1.msra.mxu0 0.0
    %2337 = vmatprep.subr.mxu0 0.0
    %2338 = vmatpush1.msra.mxu0 0.0
    %2339 = vmatprep.subr.mxu0 0.0
    %2340 = vmatpush1.msra.mxu0 0.0
    %2341 = vmatprep.subr.mxu0 0.0
    %2342 = vmatpush1.msra.mxu0 0.0
    %2343 = vmatprep.subr.mxu0 0.0
    %2344 = vmatpush1.msra.mxu0 0.0
    %2345 = vmatprep.subr.mxu0 0.0
    %2346 = vmatpush1.msra.mxu0 0.0
    %2347 = vmatprep.subr.mxu0 0.0
    %2348 = vmatpush1.msra.mxu0 0.0
    %2349 = vmatprep.subr.mxu0 0.0
    %2350 = vmatpush1.msra.mxu0 0.0
    %2351 = vmatprep.subr.mxu0 0.0
    %2352 = vmatpush1.msra.mxu0 0.0
    %2353 = vmatprep.subr.mxu0 0.0
    %2354 = vmatpush1.msra.mxu0 0.0
    %2355 = vmatprep.subr.mxu0 0.0
    %2356 = vmatpush1.msra.mxu0 0.0
    %2357 = vmatprep.subr.mxu0 0.0
    %2358 = vmatpush1.msra.mxu0 0.0
    %2359 = vmatprep.subr.mxu0 0.0
    %2360 = vmatpush1.msra.mxu0 0.0
    %2361 = vmatprep.subr.mxu0 0.0
    %2362 = vmatpush1.msra.mxu0 0.0
    %2363 = vmatprep.subr.mxu0 0.0
    %2364 = vmatpush1.msra.mxu0 0.0
    %2365 = vmatprep.subr.mxu0 0.0
    %2366 = vmatpush1.msra.mxu0 0.0
    %2367 = vmatprep.subr.mxu0 0.0
    %2368 = vmatpush1.msra.mxu0 0.0
    %2369 = vmatprep.subr.mxu0 0.0
    %2370 = vmatpush1.msra.mxu0 0.0
    %2371 = vmatprep.subr.mxu0 0.0
    %2372 = vmatpush1.msra.mxu0 0.0
    %2373 = vmatprep.subr.mxu0 0.0
    %2374 = vmatpush1.msra.mxu0 0.0
    %2375 = vmatprep.subr.mxu0 0.0
    %2376 = vmatpush1.msra.mxu0 0.0
    %2377 = vmatprep.mubr.f32.mxu0 0.0
    %v2378 = vand.u32 %v2008, 4294901760
    %2379 = vmatmul.mubr.f32.gmra.mrb[0].mxu0 %v2378
    %v2380 = vpop.f32.mrb[0].mxu0
    %v2381 = vadd.f32 %v2307, %v2380
    %v2382 = vpop.f32.mrb[0].mxu0
    %2383 = vdwg.mxu0
    %2384 = vmatprep.subr.mxu0 0.0
    %v2385 = vand.u32 %v1969, 4294901760
    %2386 = vmatpush1.msra.mxu0 %v2385
    %2387 = vmatprep.subr.mxu0 0.0
    %2388 = vmatpush1.msra.mxu0 0.0
    %2389 = vmatprep.subr.mxu0 0.0
    %2390 = vmatpush1.msra.mxu0 0.0
    %2391 = vmatprep.subr.mxu0 0.0
    %2392 = vmatpush1.msra.mxu0 0.0
    %2393 = vmatprep.subr.mxu0 0.0
    %2394 = vmatpush1.msra.mxu0 0.0
    %2395 = vmatprep.subr.mxu0 0.0
    %2396 = vmatpush1.msra.mxu0 0.0
    %2397 = vmatprep.subr.mxu0 0.0
    %2398 = vmatpush1.msra.mxu0 0.0
    %2399 = vmatprep.subr.mxu0 0.0
    %2400 = vmatpush1.msra.mxu0 0.0
    %2401 = vmatprep.subr.mxu0 0.0
    %2402 = vmatpush1.msra.mxu0 0.0
    %2403 = vmatprep.subr.mxu0 0.0
    %2404 = vmatpush1.msra.mxu0 0.0
    %2405 = vmatprep.subr.mxu0 0.0
    %2406 = vmatpush1.msra.mxu0 0.0
    %2407 = vmatprep.subr.mxu0 0.0
    %2408 = vmatpush1.msra.mxu0 0.0
    %2409 = vmatprep.subr.mxu0 0.0
    %2410 = vmatpush1.msra.mxu0 0.0
    %2411 = vmatprep.subr.mxu0 0.0
    %2412 = vmatpush1.msra.mxu0 0.0
    %2413 = vmatprep.subr.mxu0 0.0
    %2414 = vmatpush1.msra.mxu0 0.0
    %2415 = vmatprep.subr.mxu0 0.0
    %2416 = vmatpush1.msra.mxu0 0.0
    %2417 = vmatprep.subr.mxu0 0.0
    %2418 = vmatpush1.msra.mxu0 0.0
    %2419 = vmatprep.subr.mxu0 0.0
    %2420 = vmatpush1.msra.mxu0 0.0
    %2421 = vmatprep.subr.mxu0 0.0
    %2422 = vmatpush1.msra.mxu0 0.0
    %2423 = vmatprep.subr.mxu0 0.0
    %2424 = vmatpush1.msra.mxu0 0.0
    %2425 = vmatprep.subr.mxu0 0.0
    %2426 = vmatpush1.msra.mxu0 0.0
    %2427 = vmatprep.subr.mxu0 0.0
    %2428 = vmatpush1.msra.mxu0 0.0
    %2429 = vmatprep.subr.mxu0 0.0
    %2430 = vmatpush1.msra.mxu0 0.0
    %2431 = vmatprep.subr.mxu0 0.0
    %2432 = vmatpush1.msra.mxu0 0.0
    %2433 = vmatprep.subr.mxu0 0.0
    %2434 = vmatpush1.msra.mxu0 0.0
    %2435 = vmatprep.subr.mxu0 0.0
    %2436 = vmatpush1.msra.mxu0 0.0
    %2437 = vmatprep.subr.mxu0 0.0
    %2438 = vmatpush1.msra.mxu0 0.0
    %2439 = vmatprep.subr.mxu0 0.0
    %2440 = vmatpush1.msra.mxu0 0.0
    %2441 = vmatprep.subr.mxu0 0.0
    %2442 = vmatpush1.msra.mxu0 0.0
    %2443 = vmatprep.subr.mxu0 0.0
    %2444 = vmatpush1.msra.mxu0 0.0
    %2445 = vmatprep.subr.mxu0 0.0
    %2446 = vmatpush1.msra.mxu0 0.0
    %2447 = vmatprep.subr.mxu0 0.0
    %2448 = vmatpush1.msra.mxu0 0.0
    %2449 = vmatprep.mubr.f32.mxu0 0.0
    %v2450 = vand.u32 %v2008, 4294901760
    %2451 = vmatmul.mubr.f32.gmra.mrb[0].mxu0 %v2450
    %v2452 = vpop.f32.mrb[0].mxu0
    %v2453 = vadd.f32 %v2381, %v2452
    %v2454 = vpop.f32.mrb[0].mxu0
    %2455 = vdwg.mxu0
    %v2456 = vmax.f32 %v2453, 0.0
    %2457 = vst.msk [vmem:[#allocation5] sm:$0xff] %vm498, %v2456
    // Predicated region
    $region22: #{tpu_custom_call.1} parent=1 // pred_check
      _
    $region23: #{tpu_custom_call.1} parent=1 // pred_check_branch
      %2459 = sbr.rel (0) target = $region25
    $region24: #{tpu_custom_call.1} parent=1 // pred_region
      %s2461 = ssub.s32 128, 128
      %2462 = vsyncadd [#allocation4], %s2461
      %s2464 = sshll.u32 [#allocation5], 4
      %s2465 = int_to_ptr.vmem [resolvable:$true] %s2464
      %2467 = dma.vmem_to_hbm [thread:$0]  %s2465, 128, %s4, [#allocation4]
    $region25: #{tpu_custom_call.1} parent=1 // pred_fallthru
      _
    // Predicated region
    $region26: #{tpu_custom_call.1} parent=1 // pred_check
      _
    $region27: #{tpu_custom_call.1} parent=1 // pred_check_branch
      %2469 = sbr.rel (0) target = $region29
    $region28: #{tpu_custom_call.1} parent=1 // pred_region
      %s2471 = ssub.s32 128, 128
      %2472 = vsyncadd [#allocation7], %s2471
      %s2474 = sshll.u32 [#allocation6], 4
      %s2475 = int_to_ptr.vmem [resolvable:$true] %s2474
      %2477 = dma.vmem_to_hbm [thread:$0]  %s2475, 128, %s5, [#allocation7]
    $region29: #{tpu_custom_call.1} parent=1 // pred_fallthru
      _
    // Predicated region
    $region30: #{tpu_custom_call.1} parent=1 // pred_check
      _
    $region31: #{tpu_custom_call.1} parent=1 // pred_check_branch
      %2479 = sbr.rel (0) target = $region33
    $region32: #{tpu_custom_call.1} parent=1 // pred_region
      %2480 = dma.done [#allocation4], 128
    $region33: #{tpu_custom_call.1} parent=1 // pred_fallthru
      _
    // Predicated region
    $region34: #{tpu_custom_call.1} parent=1 // pred_check
      _
    $region35: #{tpu_custom_call.1} parent=1 // pred_check_branch
      %2482 = sbr.rel (0) target = $region37
    $region36: #{tpu_custom_call.1} parent=1 // pred_region
      %2483 = dma.done [#allocation7], 128
    $region37: #{tpu_custom_call.1} parent=1 // pred_fallthru
      _
    %2484 = vsyncpa [#allocation3], 1
    %2485 = vsyncpa [#allocation4], 1
    %2486 = vsyncpa [#allocation7], 1

</llo_original>
